<compile_context>
chip_gen: v7x
topology: tpu7x:2x2x1
jax: 0.10.0
libtpu: 0.0.40
codegen_flags: <defaults>
</compile_context>

<pallas_src>
import math

import jax
import jax.numpy as jnp
from jax import lax
from jax.experimental import pallas as pl
from jax.experimental.pallas import tpu as pltpu


def _round8(n):
    return (n + 7) // 8 * 8


def _slab_offsets(d_in, c):
    """Static row offsets of w2 / w3^T / b1 / b2 / b3 inside the param slab."""
    r_w2 = _round8(d_in)             # w1 occupies rows [0, d_in)
    r_w3t = _round8(r_w2 + c)        # w2 occupies rows [r_w2, r_w2 + c)
    r_b1 = r_w3t + 1
    r_b2 = r_w3t + 2
    r_b3 = r_w3t + 3
    rows = _round8(r_b3 + 1)
    return r_w2, r_w3t, r_b1, r_b2, r_b3, rows


def pack_params(params):
    """Pack ((w1,b1),(w2,b2),(w3,b3)) into one zero-padded [rows, C] f32 slab."""
    (w1, b1), (w2, b2), (w3, b3) = params
    d_in, h1 = w1.shape
    h1_, h2 = w2.shape
    h2_, d_out = w3.shape
    assert h1_ == h1 and h2_ == h2 and d_out == 1
    c = max(h1, h2)
    r_w2, r_w3t, r_b1, r_b2, r_b3, rows = _slab_offsets(d_in, c)
    slab = jnp.zeros((rows, c), jnp.float32)
    slab = slab.at[0:d_in, 0:h1].set(w1.astype(jnp.float32))
    slab = slab.at[r_w2:r_w2 + h1, 0:h2].set(w2.astype(jnp.float32))
    slab = slab.at[r_w3t, 0:h2].set(w3[:, 0].astype(jnp.float32))
    slab = slab.at[r_b1, 0:h1].set(b1.reshape(-1).astype(jnp.float32))
    slab = slab.at[r_b2, 0:h2].set(b2.reshape(-1).astype(jnp.float32))
    slab = slab.at[r_b3, 0].set(b3.reshape(()).astype(jnp.float32))
    return slab


def mlp_kernel(x_ref, p_ref, o_ref):
    d_in = x_ref.shape[1]
    c = p_ref.shape[1]
    r_w2, r_w3t, r_b1, r_b2, r_b3, _ = _slab_offsets(d_in, c)

    x = x_ref[...]                                  # (bt, d_in)
    w1 = p_ref[0:d_in, :]                           # (d_in, c)
    w2 = p_ref[r_w2:r_w2 + c, :]                    # (c, c)   zero-padded
    w3t = p_ref[r_w3t:r_w3t + 1, :]                 # (1, c)   = w3^T
    b1 = p_ref[r_b1:r_b1 + 1, :]                    # (1, c)
    b2 = p_ref[r_b2:r_b2 + 1, :]                    # (1, c)
    b3 = p_ref[r_b3:r_b3 + 1, 0:1]                  # (1, 1)

    h1 = jnp.maximum(
        jnp.dot(x, w1, preferred_element_type=jnp.float32) + b1, 0.0)
    h2 = jnp.maximum(
        jnp.dot(h1, w2, preferred_element_type=jnp.float32) + b2, 0.0)
    # Final layer computed transposed: (1,c) . (bt,c)^T -> (1, bt) so the batch
    # dimension lands on the lane axis of the output block (lane-dense store).
    out = lax.dot_general(
        w3t, h2,
        dimension_numbers=(((1,), (1,)), ((), ())),
        preferred_element_type=jnp.float32) + b3
    o_ref[...] = out.astype(o_ref.dtype)


def regressor_forward(x, params, *, batch_tile=1024):
    """Forward pass of the Regressor MLP as one fused Pallas kernel.

    Returns an array of shape (batch, 1), matching the PyTorch module.
    """
    x = x.astype(jnp.float32)
    B, d_in = x.shape
    slab = pack_params(params)

    if B <= batch_tile:
        tile = B                      # single grid step, no padding
    else:
        assert batch_tile % 128 == 0, "batch_tile must be a multiple of 128"
        tile = batch_tile
    n_tiles = pl.cdiv(B, tile)
    Bp = n_tiles * tile
    if Bp != B:                       # ragged batch: pad, then slice the output
        x = jnp.pad(x, ((0, Bp - B), (0, 0)))

    out = pl.pallas_call(
        mlp_kernel,
        out_shape=jax.ShapeDtypeStruct((1, Bp), jnp.float32),
        grid_spec=pltpu.PrefetchScalarGridSpec(
            num_scalar_prefetch=0,
            grid=(n_tiles,),
            in_specs=[
                pl.BlockSpec((tile, d_in), lambda i: (i, 0)),    # x batch tile
                pl.BlockSpec(slab.shape, lambda i: (0, 0)),      # resident slab
            ],
            out_specs=pl.BlockSpec((1, tile), lambda i: (0, i)),  # lane-dense
        ),
        compiler_params=pltpu.CompilerParams(
            dimension_semantics=("parallel",),
        ),
    )(x, slab)

    return out.reshape(Bp, 1)[:B]


def init_linear(key, fan_in, fan_out):
    """PyTorch-style Linear init: U(-1/sqrt(fan_in), 1/sqrt(fan_in)).

    Returns W as [fan_in, fan_out] (pre-transposed for x @ W) and b as [1, fan_out].
    """
    kw, kb = jax.random.split(key)
    bound = 1.0 / math.sqrt(fan_in)
    w = jax.random.uniform(kw, (fan_in, fan_out), jnp.float32, -bound, bound)
    b = jax.random.uniform(kb, (1, fan_out), jnp.float32, -bound, bound)
    return w, b


def reference_forward(x, params):
    (w1, b1), (w2, b2), (w3, b3) = params
    h = jnp.maximum(x @ w1 + b1, 0.0)
    h = jnp.maximum(h @ w2 + b2, 0.0)
    return h @ w3 + b3


if __name__ == "__main__":
    # Shapes consistent with the module: 8 numeric features + 5 one-hot
    # ocean-proximity categories = 13 inputs, hidden_layers=[15, 15], output 1.
    input_size = 13
    hidden = [15, 15]
    output_size = 1

    key = jax.random.PRNGKey(0)
    k_x, k1, k2, k3 = jax.random.split(key, 4)
    params = (
        init_linear(k1, input_size, hidden[0]),
        init_linear(k2, hidden[0], hidden[1]),
        init_linear(k3, hidden[1], output_size),
    )

    # Inputs are MinMax-scaled in the module's preprocessor -> U[0, 1).
    # Batch large enough to exercise the tiled streaming path; grid length 2
    # keeps both v7x TensorCores busy via the "parallel" batch axis.
    batch = 2048
    x = jax.random.uniform(k_x, (batch, input_size), jnp.float32)

    y = jax.block_until_ready(regressor_forward(x, params, batch_tile=1024))
    ref = reference_forward(x, params)
    assert y.shape == (batch, output_size)
    assert jnp.allclose(y, ref, atol=1e-4, rtol=1e-4)

    # Tiny-batch path (single grid step), matching the module's toy usage.
    x_small = x[:8]
    y_small = jax.block_until_ready(regressor_forward(x_small, params))
    assert y_small.shape == (8, output_size)
    assert jnp.allclose(y_small, ref[:8], atol=1e-4, rtol=1e-4)

    print("KERNEL_OK")
</pallas_src>

<mosaic_0001>
module attributes {stable_mosaic.version = 11 : i64} {
  func.func @mlp_kernel(%arg0: i32, %arg1: memref<1024x13xf32, #tpu.memory_space<vmem>>, %arg2: memref<40x15xf32, #tpu.memory_space<vmem>>, %arg3: memref<1x1024xf32, #tpu.memory_space<vmem>>) attributes {dimension_semantics = [#tpu.dimension_semantics<parallel>], iteration_bounds = array<i64: 2>, scalar_prefetch = 0 : i64, scratch_operands = 0 : i64, tpu.core_type = #tpu.core_type<tc>, window_params = [{transform_indices = @transform_0, window_bounds = array<i64: 1024, 13>}, {pipeline_mode = #tpu.pipeline_mode<synchronous>, transform_indices = @transform_1, window_bounds = array<i64: 40, 15>}, {transform_indices = @transform_2, window_bounds = array<i64: 1, 1024>}]} {
    %c0 = arith.constant 0 : index
    %c0_0 = arith.constant 0 : index
    %0 = vector.load %arg1[%c0, %c0_0] : memref<1024x13xf32, #tpu.memory_space<vmem>>, vector<1024x13xf32>
    %c0_1 = arith.constant 0 : index
    %c0_2 = arith.constant 0 : index
    %1 = vector.load %arg2[%c0_1, %c0_2] : memref<40x15xf32, #tpu.memory_space<vmem>>, vector<13x15xf32>
    %c16 = arith.constant 16 : index
    %c0_3 = arith.constant 0 : index
    %2 = vector.load %arg2[%c16, %c0_3] : memref<40x15xf32, #tpu.memory_space<vmem>>, vector<15x15xf32>
    %c32 = arith.constant 32 : index
    %c0_4 = arith.constant 0 : index
    %3 = vector.load %arg2[%c32, %c0_4] : memref<40x15xf32, #tpu.memory_space<vmem>>, vector<1x15xf32>
    %c33 = arith.constant 33 : index
    %c0_5 = arith.constant 0 : index
    %4 = vector.load %arg2[%c33, %c0_5] : memref<40x15xf32, #tpu.memory_space<vmem>>, vector<1x15xf32>
    %c34 = arith.constant 34 : index
    %c0_6 = arith.constant 0 : index
    %5 = vector.load %arg2[%c34, %c0_6] : memref<40x15xf32, #tpu.memory_space<vmem>>, vector<1x15xf32>
    %c35 = arith.constant 35 : index
    %c0_7 = arith.constant 0 : index
    %6 = vector.load %arg2[%c35, %c0_7] : memref<40x15xf32, #tpu.memory_space<vmem>>, vector<1x1xf32>
    %cst = arith.constant dense<0.000000e+00> : vector<1024x15xf32>
    %7 = tpu.matmul %0, %1, %cst {dimension_numbers = #tpu.dot_dimension_numbers<[1], [0], [0], [1], [0, 0, 1, 1], [], []>} : vector<1024x13xf32>, vector<13x15xf32>, vector<1024x15xf32> -> vector<1024x15xf32>
    %8 = vector.broadcast %4 : vector<1x15xf32> to vector<1024x15xf32>
    %9 = arith.addf %7, %8 : vector<1024x15xf32>
    %cst_8 = arith.constant 0.000000e+00 : f32
    %10 = vector.broadcast %cst_8 : f32 to vector<1024x15xf32>
    %11 = arith.maximumf %9, %10 : vector<1024x15xf32>
    %cst_9 = arith.constant dense<0.000000e+00> : vector<1024x15xf32>
    %12 = tpu.matmul %11, %2, %cst_9 {dimension_numbers = #tpu.dot_dimension_numbers<[1], [0], [0], [1], [0, 0, 1, 1], [], []>} : vector<1024x15xf32>, vector<15x15xf32>, vector<1024x15xf32> -> vector<1024x15xf32>
    %13 = vector.broadcast %5 : vector<1x15xf32> to vector<1024x15xf32>
    %14 = arith.addf %12, %13 : vector<1024x15xf32>
    %cst_10 = arith.constant 0.000000e+00 : f32
    %15 = vector.broadcast %cst_10 : f32 to vector<1024x15xf32>
    %16 = arith.maximumf %14, %15 : vector<1024x15xf32>
    %cst_11 = arith.constant dense<0.000000e+00> : vector<1x1024xf32>
    %17 = tpu.matmul %3, %16, %cst_11 {dimension_numbers = #tpu.dot_dimension_numbers<[1], [1], [0], [0], [0, 0, 1, 0], [], []>} : vector<1x15xf32>, vector<1024x15xf32>, vector<1x1024xf32> -> vector<1x1024xf32>
    %18 = vector.broadcast %6 : vector<1x1xf32> to vector<1x1024xf32>
    %19 = arith.addf %17, %18 : vector<1x1024xf32>
    %c0_12 = arith.constant 0 : index
    %c0_13 = arith.constant 0 : index
    %20 = vector.load %arg3[%c0_12, %c0_13] : memref<1x1024xf32, #tpu.memory_space<vmem>>, vector<1x1024xf32>
    tpu.vector_store %arg3[%c0_12, %c0_13], %19 {strides = array<i32>} : memref<1x1024xf32, #tpu.memory_space<vmem>>, vector<1x1024xf32>,
    return
  }
  func.func @transform_0(%arg0: i32) -> (i32, i32) {
    %c0_i32 = arith.constant 0 : i32
    %c0_i32_0 = arith.constant 0 : i32
    return %arg0, %c0_i32 : i32, i32
  }
  func.func @transform_1(%arg0: i32) -> (i32, i32) {
    %c0_i32 = arith.constant 0 : i32
    %c0_i32_0 = arith.constant 0 : i32
    %c0_i32_1 = arith.constant 0 : i32
    return %c0_i32, %c0_i32_0 : i32, i32
  }
  func.func @transform_2(%arg0: i32) -> (i32, i32) {
    %c0_i32 = arith.constant 0 : i32
    %c0_i32_0 = arith.constant 0 : i32
    return %c0_i32, %arg0 : i32, i32
  }
}

</mosaic_0001>

<llo_original>
// kernel: tpu_custom_call.1
$region0: #{tpu_custom_call.1}
  #allocation0 [shape = 'u32[]', space=smem, size = 0x4, offset = 0x4, fixed_abs, tag = 'smem constant byte address 0x4 - core index']
  #allocation1 [shape = 'u32[144,128]{1,0:T(1,128)}', space=vmem, size = 0x12000, scoped, tag = 'internal scratch']
  %s0 = inlined_call_operand.vmem [shape: f32[2048,13], index: 0, kind: input, shape index: {}]
  %s1 = inlined_call_operand.vmem [shape: f32[40,15], index: 1, kind: input, shape index: {}]
  %s2 = inlined_call_operand.hbm [shape: f32[1,2048], index: 2, kind: output, shape index: {}]
  %s3 = sld [smem:[#allocation0]]
  $region41: #{tpu_custom_call.1} parent=0
    _
  %s5 = ssub.s32 1, %s3
  %s6 = scalar_select 0, %s5, %s3
  $region1: #{tpu_custom_call.1} parent=0
    #allocation2 [shape = 'u8[8192]{0}', space=vmem, size = 0x2000, scoped, tag = 'output window, operand 0']
    #allocation3 [shape = 's32[2]{0}', space=sflag, size = 0x8, scoped, tag = 'scoped memory for tpu_custom_call.1']
    %7 = vsyncpa [#allocation3], 0
    %s8 = scalar_lea.sflag [#allocation3], 1
    %9 = vsyncpa %s8, 0
    loop: start=0, step=1, limit=4
    $region2: #{tpu_custom_call.1} parent=1 // loop_pre_header
      _
    $region3: #{tpu_custom_call.1} parent=1 // loop_header
      %s11 = sphi 0, %s15
      %p12 = scmp.ge.s32.totalorder %s11, 4
      %s21 = sphi 0, %s23
      %s24 = sphi 0, %s21
      %s25 = sphi 0, %s24
      %s41 = sphi 0, %s25
      %s45 = sphi 0, %s45
      %s47 = sphi 0, %s45
      %s48 = sphi 0, %s47
      %s62 = sphi 0, %s48
      %s68 = sphi 0, %s70
      %s71 = sphi 0, %s68
      %s72 = sphi 0, %s71
      %s88 = sphi 0, %s72
    $region4: #{tpu_custom_call.1} parent=1 // loop_header_branch
      %14 = sbr.rel (%p12) target = $region8
    $region5: #{tpu_custom_call.1} parent=1 // loop_body
      %s16 = ssub.s32 %s11, 1
      %s17 = ssub.s32 %s11, 2
      %s18 = sadd.s32 %s11, 1
      %s19 = ssub.s32 %s11, %s18
      %p20 = scmp.eq.s32.totalorder %s19, 0
      %s22 = sadd.s32 %s21, 1
      %s23 = scalar_select %p20, %s21, %s22
      %p26 = pneg %p20
      %p27 = scmp.eq.s32.totalorder %s11, 1
      %p28 = por %p26, %p27
      %p29 = scmp.ne.s32.totalorder %s21, %s24
      %p30 = scmp.eq.s32.totalorder %s11, 0
      %p31 = por %p29, %p30
      %p32 = scmp.ne.s32.totalorder %s21, %s24
      %p33 = scmp.eq.s32.totalorder %s16, 1
      %p34 = por %p32, %p33
      %p35 = scmp.ne.s32.totalorder %s24, %s25
      %p36 = scmp.eq.s32.totalorder %s16, 0
      %p37 = por %p35, %p36
      %p38 = scmp.ne.s32.totalorder %s24, %s25
      %p39 = scmp.eq.s32.totalorder %s17, 1
      %p40 = por %p38, %p39
      %p42 = scmp.ne.s32.totalorder %s25, %s41
      %p43 = scmp.eq.s32.totalorder %s17, 0
      %p44 = por %p42, %p43
      %s46 = sadd.s32 %s45, 1
      %p49 = scmp.eq.s32.totalorder %s11, 1
      %p50 = scmp.ne.s32.totalorder %s45, %s47
      %p51 = scmp.eq.s32.totalorder %s11, 0
      %p52 = por %p50, %p51
      %p53 = scmp.ne.s32.totalorder %s45, %s47
      %p54 = scmp.eq.s32.totalorder %s16, 1
      %p55 = por %p53, %p54
      %p56 = scmp.ne.s32.totalorder %s47, %s48
      %p57 = scmp.eq.s32.totalorder %s16, 0
      %p58 = por %p56, %p57
      %p59 = scmp.ne.s32.totalorder %s47, %s48
      %p60 = scmp.eq.s32.totalorder %s17, 1
      %p61 = por %p59, %p60
      %p63 = scmp.ne.s32.totalorder %s48, %s62
      %p64 = scmp.eq.s32.totalorder %s17, 0
      %p65 = por %p63, %p64
      %s66 = ssub.s32 %s11, %s18
      %p67 = scmp.eq.s32.totalorder %s66, 0
      %s69 = sadd.s32 %s68, 1
      %s70 = scalar_select %p67, %s68, %s69
      %p73 = pneg %p67
      %p74 = scmp.eq.s32.totalorder %s11, 1
      %p75 = por %p73, %p74
      %p76 = scmp.ne.s32.totalorder %s68, %s71
      %p77 = scmp.eq.s32.totalorder %s11, 0
      %p78 = por %p76, %p77
      %p79 = scmp.ne.s32.totalorder %s68, %s71
      %p80 = scmp.eq.s32.totalorder %s16, 1
      %p81 = por %p79, %p80
      %p82 = scmp.ne.s32.totalorder %s71, %s72
      %p83 = scmp.eq.s32.totalorder %s16, 0
      %p84 = por %p82, %p83
      %p85 = scmp.ne.s32.totalorder %s71, %s72
      %p86 = scmp.eq.s32.totalorder %s17, 1
      %p87 = por %p85, %p86
      %p89 = scmp.ne.s32.totalorder %s72, %s88
      %p90 = scmp.eq.s32.totalorder %s17, 0
      %p91 = por %p89, %p90
      %p92 = scmp.le.s32.totalorder 1, %s11
      %p93 = scmp.lt.s32.totalorder %s11, 3
      %p94 = pnand %p92, %p93
      %p95 = pneg %p94
      // Predicated region
      $region9: #{tpu_custom_call.1} parent=5 // pred_check
        _
      $region10: #{tpu_custom_call.1} parent=5 // pred_check_branch
        %97 = sbr.rel (%p94) target = $region12
      $region11: #{tpu_custom_call.1} parent=5 // pred_region
        %s98 = ssub.s32 %s11, 1
        // Predicated region
        $region13: #{tpu_custom_call.1} parent=11 // pred_check
          %p99 = pneg %p58
        $region14: #{tpu_custom_call.1} parent=11 // pred_check_branch
          %101 = sbr.rel (%p99) target = $region16
        $region15: #{tpu_custom_call.1} parent=11 // pred_region
          _
        $region16: #{tpu_custom_call.1} parent=11 // pred_fallthru
          _
      $region12: #{tpu_custom_call.1} parent=5 // pred_fallthru
        _
      %p102 = scmp.lt.s32.totalorder %s11, 2
      // Predicated region
      $region17: #{tpu_custom_call.1} parent=5 // pred_check
        %p103 = pneg %p102
      $region18: #{tpu_custom_call.1} parent=5 // pred_check_branch
        %105 = sbr.rel (%p103) target = $region20
      $region19: #{tpu_custom_call.1} parent=5 // pred_region
        // Predicated region
        $region21: #{tpu_custom_call.1} parent=19 // pred_check
          %p106 = pneg %p31
        $region22: #{tpu_custom_call.1} parent=19 // pred_check_branch
          %108 = sbr.rel (%p106) target = $region24
        $region23: #{tpu_custom_call.1} parent=19 // pred_region
          %s109 = smul.u32 128, %s11
          %p110 = scmp.lt.s32.totalorder %s109, 255
          %s111 = scalar_select %p110, %s109, 255
          %s112 = smul.addr %s111, 8
          %s113 = scalar_lea.vmem %s0, %s112
          %s114 = smul.u32 128, %s11
        $region24: #{tpu_custom_call.1} parent=19 // pred_fallthru
          _
      $region20: #{tpu_custom_call.1} parent=5 // pred_fallthru
        _
      %p115 = scmp.le.s32.totalorder 1, %s11
      %p116 = scmp.lt.s32.totalorder %s11, 3
      %p117 = pnand %p115, %p116
      %p118 = pneg %p117
      // Predicated region
      $region25: #{tpu_custom_call.1} parent=5 // pred_check
        _
      $region26: #{tpu_custom_call.1} parent=5 // pred_check_branch
        %120 = sbr.rel (%p117) target = $region28
      $region27: #{tpu_custom_call.1} parent=5 // pred_region
        %s121 = ssub.s32 %s11, 1
        %s122 = smul.u32 128, %s16
        %p123 = scmp.lt.s32.totalorder %s122, 255
        %s124 = scalar_select %p123, %s122, 255
        %s125 = smul.addr %s124, 8
        %s126 = scalar_lea.vmem %s0, %s125
        %p127 = pneg %p37
        %p128 = pneg %p34
        %p129 = pneg %p58
        %p130 = pneg %p55
        %p131 = pneg %p84
        %p132 = pneg %p81
        %s133 = sand.u32 %s71, 1
        %s134 = scalar_lea.sflag [#allocation3], %s133
        %s135 = sand.u32 %s71, 1
        %s136 = smul.addr %s135, 8
        %s137 = scalar_lea.vmem [#allocation2], %s136
        %s138 = smul.u32 128, %s16
        %p139 = scmp.lt.s32.totalorder %s138, 255
        %s140 = scalar_select %p139, %s138, 255
        %s141 = smul.addr %s140, 8
        %s142 = scalar_lea.vmem %s0, %s141
        %s143 = smul.u32 128, %s16
        %s144 = smul.u32 8, %s16
        %v145 = vld [vmem:[%s142] sm:$0xff]
        %v146 = vld [vmem:[%s142 + $0x8] sm:$0xff]
        %v147 = vld [vmem:[%s142 + $0x10] sm:$0xff]
        %v148 = vld [vmem:[%s142 + $0x18] sm:$0xff]
        %v149 = vld [vmem:[%s142 + $0x20] sm:$0xff]
        %v150 = vld [vmem:[%s142 + $0x28] sm:$0xff]
        %v151 = vld [vmem:[%s142 + $0x30] sm:$0xff]
        %v152 = vld [vmem:[%s142 + $0x38] sm:$0xff]
        %v153 = vld [vmem:[%s142 + $0x40] sm:$0xff]
        %v154 = vld [vmem:[%s142 + $0x48] sm:$0xff]
        %v155 = vld [vmem:[%s142 + $0x50] sm:$0xff]
        %v156 = vld [vmem:[%s142 + $0x58] sm:$0xff]
        %v157 = vld [vmem:[%s142 + $0x60] sm:$0xff]
        %v158 = vld [vmem:[%s142 + $0x68] sm:$0xff]
        %v159 = vld [vmem:[%s142 + $0x70] sm:$0xff]
        %v160 = vld [vmem:[%s142 + $0x78] sm:$0xff]
        %v161 = vld [vmem:[%s142 + $0x80] sm:$0xff]
        %v162 = vld [vmem:[%s142 + $0x88] sm:$0xff]
        %v163 = vld [vmem:[%s142 + $0x90] sm:$0xff]
        %v164 = vld [vmem:[%s142 + $0x98] sm:$0xff]
        %v165 = vld [vmem:[%s142 + $0xa0] sm:$0xff]
        %v166 = vld [vmem:[%s142 + $0xa8] sm:$0xff]
        %v167 = vld [vmem:[%s142 + $0xb0] sm:$0xff]
        %v168 = vld [vmem:[%s142 + $0xb8] sm:$0xff]
        %v169 = vld [vmem:[%s142 + $0xc0] sm:$0xff]
        %v170 = vld [vmem:[%s142 + $0xc8] sm:$0xff]
        %v171 = vld [vmem:[%s142 + $0xd0] sm:$0xff]
        %v172 = vld [vmem:[%s142 + $0xd8] sm:$0xff]
        %v173 = vld [vmem:[%s142 + $0xe0] sm:$0xff]
        %v174 = vld [vmem:[%s142 + $0xe8] sm:$0xff]
        %v175 = vld [vmem:[%s142 + $0xf0] sm:$0xff]
        %v176 = vld [vmem:[%s142 + $0xf8] sm:$0xff]
        %v177 = vld [vmem:[%s142 + $0x100] sm:$0xff]
        %v178 = vld [vmem:[%s142 + $0x108] sm:$0xff]
        %v179 = vld [vmem:[%s142 + $0x110] sm:$0xff]
        %v180 = vld [vmem:[%s142 + $0x118] sm:$0xff]
        %v181 = vld [vmem:[%s142 + $0x120] sm:$0xff]
        %v182 = vld [vmem:[%s142 + $0x128] sm:$0xff]
        %v183 = vld [vmem:[%s142 + $0x130] sm:$0xff]
        %v184 = vld [vmem:[%s142 + $0x138] sm:$0xff]
        %v185 = vld [vmem:[%s142 + $0x140] sm:$0xff]
        %v186 = vld [vmem:[%s142 + $0x148] sm:$0xff]
        %v187 = vld [vmem:[%s142 + $0x150] sm:$0xff]
        %v188 = vld [vmem:[%s142 + $0x158] sm:$0xff]
        %v189 = vld [vmem:[%s142 + $0x160] sm:$0xff]
        %v190 = vld [vmem:[%s142 + $0x168] sm:$0xff]
        %v191 = vld [vmem:[%s142 + $0x170] sm:$0xff]
        %v192 = vld [vmem:[%s142 + $0x178] sm:$0xff]
        %v193 = vld [vmem:[%s142 + $0x180] sm:$0xff]
        %v194 = vld [vmem:[%s142 + $0x188] sm:$0xff]
        %v195 = vld [vmem:[%s142 + $0x190] sm:$0xff]
        %v196 = vld [vmem:[%s142 + $0x198] sm:$0xff]
        %v197 = vld [vmem:[%s142 + $0x1a0] sm:$0xff]
        %v198 = vld [vmem:[%s142 + $0x1a8] sm:$0xff]
        %v199 = vld [vmem:[%s142 + $0x1b0] sm:$0xff]
        %v200 = vld [vmem:[%s142 + $0x1b8] sm:$0xff]
        %v201 = vld [vmem:[%s142 + $0x1c0] sm:$0xff]
        %v202 = vld [vmem:[%s142 + $0x1c8] sm:$0xff]
        %v203 = vld [vmem:[%s142 + $0x1d0] sm:$0xff]
        %v204 = vld [vmem:[%s142 + $0x1d8] sm:$0xff]
        %v205 = vld [vmem:[%s142 + $0x1e0] sm:$0xff]
        %v206 = vld [vmem:[%s142 + $0x1e8] sm:$0xff]
        %v207 = vld [vmem:[%s142 + $0x1f0] sm:$0xff]
        %v208 = vld [vmem:[%s142 + $0x1f8] sm:$0xff]
        %v209 = vld [vmem:[%s142 + $0x200] sm:$0xff]
        %v210 = vld [vmem:[%s142 + $0x208] sm:$0xff]
        %v211 = vld [vmem:[%s142 + $0x210] sm:$0xff]
        %v212 = vld [vmem:[%s142 + $0x218] sm:$0xff]
        %v213 = vld [vmem:[%s142 + $0x220] sm:$0xff]
        %v214 = vld [vmem:[%s142 + $0x228] sm:$0xff]
        %v215 = vld [vmem:[%s142 + $0x230] sm:$0xff]
        %v216 = vld [vmem:[%s142 + $0x238] sm:$0xff]
        %v217 = vld [vmem:[%s142 + $0x240] sm:$0xff]
        %v218 = vld [vmem:[%s142 + $0x248] sm:$0xff]
        %v219 = vld [vmem:[%s142 + $0x250] sm:$0xff]
        %v220 = vld [vmem:[%s142 + $0x258] sm:$0xff]
        %v221 = vld [vmem:[%s142 + $0x260] sm:$0xff]
        %v222 = vld [vmem:[%s142 + $0x268] sm:$0xff]
        %v223 = vld [vmem:[%s142 + $0x270] sm:$0xff]
        %v224 = vld [vmem:[%s142 + $0x278] sm:$0xff]
        %v225 = vld [vmem:[%s142 + $0x280] sm:$0xff]
        %v226 = vld [vmem:[%s142 + $0x288] sm:$0xff]
        %v227 = vld [vmem:[%s142 + $0x290] sm:$0xff]
        %v228 = vld [vmem:[%s142 + $0x298] sm:$0xff]
        %v229 = vld [vmem:[%s142 + $0x2a0] sm:$0xff]
        %v230 = vld [vmem:[%s142 + $0x2a8] sm:$0xff]
        %v231 = vld [vmem:[%s142 + $0x2b0] sm:$0xff]
        %v232 = vld [vmem:[%s142 + $0x2b8] sm:$0xff]
        %v233 = vld [vmem:[%s142 + $0x2c0] sm:$0xff]
        %v234 = vld [vmem:[%s142 + $0x2c8] sm:$0xff]
        %v235 = vld [vmem:[%s142 + $0x2d0] sm:$0xff]
        %v236 = vld [vmem:[%s142 + $0x2d8] sm:$0xff]
        %v237 = vld [vmem:[%s142 + $0x2e0] sm:$0xff]
        %v238 = vld [vmem:[%s142 + $0x2e8] sm:$0xff]
        %v239 = vld [vmem:[%s142 + $0x2f0] sm:$0xff]
        %v240 = vld [vmem:[%s142 + $0x2f8] sm:$0xff]
        %v241 = vld [vmem:[%s142 + $0x300] sm:$0xff]
        %v242 = vld [vmem:[%s142 + $0x308] sm:$0xff]
        %v243 = vld [vmem:[%s142 + $0x310] sm:$0xff]
        %v244 = vld [vmem:[%s142 + $0x318] sm:$0xff]
        %v245 = vld [vmem:[%s142 + $0x320] sm:$0xff]
        %v246 = vld [vmem:[%s142 + $0x328] sm:$0xff]
        %v247 = vld [vmem:[%s142 + $0x330] sm:$0xff]
        %v248 = vld [vmem:[%s142 + $0x338] sm:$0xff]
        %v249 = vld [vmem:[%s142 + $0x340] sm:$0xff]
        %v250 = vld [vmem:[%s142 + $0x348] sm:$0xff]
        %v251 = vld [vmem:[%s142 + $0x350] sm:$0xff]
        %v252 = vld [vmem:[%s142 + $0x358] sm:$0xff]
        %v253 = vld [vmem:[%s142 + $0x360] sm:$0xff]
        %v254 = vld [vmem:[%s142 + $0x368] sm:$0xff]
        %v255 = vld [vmem:[%s142 + $0x370] sm:$0xff]
        %v256 = vld [vmem:[%s142 + $0x378] sm:$0xff]
        %v257 = vld [vmem:[%s142 + $0x380] sm:$0xff]
        %v258 = vld [vmem:[%s142 + $0x388] sm:$0xff]
        %v259 = vld [vmem:[%s142 + $0x390] sm:$0xff]
        %v260 = vld [vmem:[%s142 + $0x398] sm:$0xff]
        %v261 = vld [vmem:[%s142 + $0x3a0] sm:$0xff]
        %v262 = vld [vmem:[%s142 + $0x3a8] sm:$0xff]
        %v263 = vld [vmem:[%s142 + $0x3b0] sm:$0xff]
        %v264 = vld [vmem:[%s142 + $0x3b8] sm:$0xff]
        %v265 = vld [vmem:[%s142 + $0x3c0] sm:$0xff]
        %v266 = vld [vmem:[%s142 + $0x3c8] sm:$0xff]
        %v267 = vld [vmem:[%s142 + $0x3d0] sm:$0xff]
        %v268 = vld [vmem:[%s142 + $0x3d8] sm:$0xff]
        %v269 = vld [vmem:[%s142 + $0x3e0] sm:$0xff]
        %v270 = vld [vmem:[%s142 + $0x3e8] sm:$0xff]
        %v271 = vld [vmem:[%s142 + $0x3f0] sm:$0xff]
        %v272 = vld [vmem:[%s142 + $0x3f8] sm:$0xff]
        %v273 = vld [vmem:[%s1] sm:$0xff]
        %v274 = vld [vmem:[%s1 + $0x8] sm:$0x1f]
        %v275 = vld [vmem:[%s1 + $0x10] sm:$0xff]
        %v276 = vld [vmem:[%s1 + $0x18] sm:$0x7f]
        %v277 = vld [vmem:[%s1 + $0x20] sm:$0x1]
        %v278 = vld [vmem:[%s1 + $0x21] sm:$0x1]
        %v279 = vld [vmem:[%s1 + $0x22] sm:$0x1]
        %v280 = vld [vmem:[%s1 + $0x23] sm:$0x1]
        %v281 = vlaneseq
        %v282 = vshrl.u32 %v281, 7
        %v283 = vsub.s32 0, %v282
        %v284 = vrot.slane %v278, %v283
        %vm285 = vcmask 105472
        %v287 = vsel %vm285, %v145, 0
        %v290 = vsel %vm285, %v146, 0
        %v293 = vsel %vm285, %v147, 0
        %v296 = vsel %vm285, %v148, 0
        %v299 = vsel %vm285, %v149, 0
        %v302 = vsel %vm285, %v150, 0
        %v305 = vsel %vm285, %v151, 0
        %v308 = vsel %vm285, %v152, 0
        %v311 = vsel %vm285, %v153, 0
        %v314 = vsel %vm285, %v154, 0
        %v317 = vsel %vm285, %v155, 0
        %v320 = vsel %vm285, %v156, 0
        %v323 = vsel %vm285, %v157, 0
        %v326 = vsel %vm285, %v158, 0
        %v329 = vsel %vm285, %v159, 0
        %v332 = vsel %vm285, %v160, 0
        %v335 = vsel %vm285, %v161, 0
        %v338 = vsel %vm285, %v162, 0
        %v341 = vsel %vm285, %v163, 0
        %v344 = vsel %vm285, %v164, 0
        %v347 = vsel %vm285, %v165, 0
        %v350 = vsel %vm285, %v166, 0
        %v353 = vsel %vm285, %v167, 0
        %v356 = vsel %vm285, %v168, 0
        %v359 = vsel %vm285, %v169, 0
        %v362 = vsel %vm285, %v170, 0
        %v365 = vsel %vm285, %v171, 0
        %v368 = vsel %vm285, %v172, 0
        %v371 = vsel %vm285, %v173, 0
        %v374 = vsel %vm285, %v174, 0
        %v377 = vsel %vm285, %v175, 0
        %v380 = vsel %vm285, %v176, 0
        %v383 = vsel %vm285, %v177, 0
        %v386 = vsel %vm285, %v178, 0
        %v389 = vsel %vm285, %v179, 0
        %v392 = vsel %vm285, %v180, 0
        %v395 = vsel %vm285, %v181, 0
        %v398 = vsel %vm285, %v182, 0
        %v401 = vsel %vm285, %v183, 0
        %v404 = vsel %vm285, %v184, 0
        %v407 = vsel %vm285, %v185, 0
        %v410 = vsel %vm285, %v186, 0
        %v413 = vsel %vm285, %v187, 0
        %v416 = vsel %vm285, %v188, 0
        %v419 = vsel %vm285, %v189, 0
        %v422 = vsel %vm285, %v190, 0
        %v425 = vsel %vm285, %v191, 0
        %v428 = vsel %vm285, %v192, 0
        %v431 = vsel %vm285, %v193, 0
        %v434 = vsel %vm285, %v194, 0
        %v437 = vsel %vm285, %v195, 0
        %v440 = vsel %vm285, %v196, 0
        %v443 = vsel %vm285, %v197, 0
        %v446 = vsel %vm285, %v198, 0
        %v449 = vsel %vm285, %v199, 0
        %v452 = vsel %vm285, %v200, 0
        %v455 = vsel %vm285, %v201, 0
        %v458 = vsel %vm285, %v202, 0
        %v461 = vsel %vm285, %v203, 0
        %v464 = vsel %vm285, %v204, 0
        %v467 = vsel %vm285, %v205, 0
        %v470 = vsel %vm285, %v206, 0
        %v473 = vsel %vm285, %v207, 0
        %v476 = vsel %vm285, %v208, 0
        %v479 = vsel %vm285, %v209, 0
        %v482 = vsel %vm285, %v210, 0
        %v485 = vsel %vm285, %v211, 0
        %v488 = vsel %vm285, %v212, 0
        %v491 = vsel %vm285, %v213, 0
        %v494 = vsel %vm285, %v214, 0
        %v497 = vsel %vm285, %v215, 0
        %v500 = vsel %vm285, %v216, 0
        %v503 = vsel %vm285, %v217, 0
        %v506 = vsel %vm285, %v218, 0
        %v509 = vsel %vm285, %v219, 0
        %v512 = vsel %vm285, %v220, 0
        %v515 = vsel %vm285, %v221, 0
        %v518 = vsel %vm285, %v222, 0
        %v521 = vsel %vm285, %v223, 0
        %v524 = vsel %vm285, %v224, 0
        %v527 = vsel %vm285, %v225, 0
        %v530 = vsel %vm285, %v226, 0
        %v533 = vsel %vm285, %v227, 0
        %v536 = vsel %vm285, %v228, 0
        %v539 = vsel %vm285, %v229, 0
        %v542 = vsel %vm285, %v230, 0
        %v545 = vsel %vm285, %v231, 0
        %v548 = vsel %vm285, %v232, 0
        %v551 = vsel %vm285, %v233, 0
        %v554 = vsel %vm285, %v234, 0
        %v557 = vsel %vm285, %v235, 0
        %v560 = vsel %vm285, %v236, 0
        %v563 = vsel %vm285, %v237, 0
        %v566 = vsel %vm285, %v238, 0
        %v569 = vsel %vm285, %v239, 0
        %v572 = vsel %vm285, %v240, 0
        %v575 = vsel %vm285, %v241, 0
        %v578 = vsel %vm285, %v242, 0
        %v581 = vsel %vm285, %v243, 0
        %v584 = vsel %vm285, %v244, 0
        %v587 = vsel %vm285, %v245, 0
        %v590 = vsel %vm285, %v246, 0
        %v593 = vsel %vm285, %v247, 0
        %v596 = vsel %vm285, %v248, 0
        %v599 = vsel %vm285, %v249, 0
        %v602 = vsel %vm285, %v250, 0
        %v605 = vsel %vm285, %v251, 0
        %v608 = vsel %vm285, %v252, 0
        %v611 = vsel %vm285, %v253, 0
        %v614 = vsel %vm285, %v254, 0
        %v617 = vsel %vm285, %v255, 0
        %v620 = vsel %vm285, %v256, 0
        %v623 = vsel %vm285, %v257, 0
        %v626 = vsel %vm285, %v258, 0
        %v629 = vsel %vm285, %v259, 0
        %v632 = vsel %vm285, %v260, 0
        %v635 = vsel %vm285, %v261, 0
        %v638 = vsel %vm285, %v262, 0
        %v641 = vsel %vm285, %v263, 0
        %v644 = vsel %vm285, %v264, 0
        %v647 = vsel %vm285, %v265, 0
        %v650 = vsel %vm285, %v266, 0
        %v653 = vsel %vm285, %v267, 0
        %v656 = vsel %vm285, %v268, 0
        %v659 = vsel %vm285, %v269, 0
        %v662 = vsel %vm285, %v270, 0
        %v665 = vsel %vm285, %v271, 0
        %v668 = vsel %vm285, %v272, 0
        %vm670 = vcmask 1044480
        %v672 = vsel %vm670, %v274, 0
        %674 = vmatprep.subr.mxu0 0.0
        %675 = vmatpush1.msra.mxu0 %v273
        %676 = vmatprep.subr.mxu0 0.0
        %677 = vmatpush1.msra.mxu0 %v672
        %678 = vmatprep.subr.mxu0 0.0
        %679 = vmatpush1.msra.mxu0 0.0
        %680 = vmatprep.subr.mxu0 0.0
        %681 = vmatpush1.msra.mxu0 0.0
        %682 = vmatprep.subr.mxu0 0.0
        %683 = vmatpush1.msra.mxu0 0.0
        %684 = vmatprep.subr.mxu0 0.0
        %685 = vmatpush1.msra.mxu0 0.0
        %686 = vmatprep.subr.mxu0 0.0
        %687 = vmatpush1.msra.mxu0 0.0
        %688 = vmatprep.subr.mxu0 0.0
        %689 = vmatpush1.msra.mxu0 0.0
        %690 = vmatprep.subr.mxu0 0.0
        %691 = vmatpush1.msra.mxu0 0.0
        %692 = vmatprep.subr.mxu0 0.0
        %693 = vmatpush1.msra.mxu0 0.0
        %694 = vmatprep.subr.mxu0 0.0
        %695 = vmatpush1.msra.mxu0 0.0
        %696 = vmatprep.subr.mxu0 0.0
        %697 = vmatpush1.msra.mxu0 0.0
        %698 = vmatprep.subr.mxu0 0.0
        %699 = vmatpush1.msra.mxu0 0.0
        %700 = vmatprep.subr.mxu0 0.0
        %701 = vmatpush1.msra.mxu0 0.0
        %702 = vmatprep.subr.mxu0 0.0
        %703 = vmatpush1.msra.mxu0 0.0
        %704 = vmatprep.subr.mxu0 0.0
        %705 = vmatpush1.msra.mxu0 0.0
        %706 = vmatprep.subr.mxu0 0.0
        %707 = vmatpush1.msra.mxu0 0.0
        %708 = vmatprep.subr.mxu0 0.0
        %709 = vmatpush1.msra.mxu0 0.0
        %710 = vmatprep.subr.mxu0 0.0
        %711 = vmatpush1.msra.mxu0 0.0
        %712 = vmatprep.subr.mxu0 0.0
        %713 = vmatpush1.msra.mxu0 0.0
        %714 = vmatprep.subr.mxu0 0.0
        %715 = vmatpush1.msra.mxu0 0.0
        %716 = vmatprep.subr.mxu0 0.0
        %717 = vmatpush1.msra.mxu0 0.0
        %718 = vmatprep.subr.mxu0 0.0
        %719 = vmatpush1.msra.mxu0 0.0
        %720 = vmatprep.subr.mxu0 0.0
        %721 = vmatpush1.msra.mxu0 0.0
        %722 = vmatprep.subr.mxu0 0.0
        %723 = vmatpush1.msra.mxu0 0.0
        %724 = vmatprep.subr.mxu0 0.0
        %725 = vmatpush1.msra.mxu0 0.0
        %726 = vmatprep.subr.mxu0 0.0
        %727 = vmatpush1.msra.mxu0 0.0
        %728 = vmatprep.subr.mxu0 0.0
        %729 = vmatpush1.msra.mxu0 0.0
        %730 = vmatprep.subr.mxu0 0.0
        %731 = vmatpush1.msra.mxu0 0.0
        %732 = vmatprep.subr.mxu0 0.0
        %733 = vmatpush1.msra.mxu0 0.0
        %734 = vmatprep.subr.mxu0 0.0
        %735 = vmatpush1.msra.mxu0 0.0
        %736 = vmatprep.subr.mxu0 0.0
        %737 = vmatpush1.msra.mxu0 0.0
        %738 = vmatprep.mubr.f32.mxu0 0.0
        %739 = vmatmul.mubr.f32.gmra.mrb[0].mxu0 %v287
        %v740 = vpop.f32.mrb[0].mxu0
        %v741 = vadd.f32 %v284, %v740
        %v742 = vpop.f32.mrb[0].mxu0
        %743 = vmatprep.mubr.f32.mxu0 0.0
        %744 = vmatmul.mubr.f32.gmra.mrb[0].mxu0 %v290
        %v745 = vpop.f32.mrb[0].mxu0
        %v746 = vadd.f32 %v284, %v745
        %v747 = vpop.f32.mrb[0].mxu0
        %748 = vmatprep.mubr.f32.mxu0 0.0
        %749 = vmatmul.mubr.f32.gmra.mrb[0].mxu0 %v293
        %v750 = vpop.f32.mrb[0].mxu0
        %v751 = vadd.f32 %v284, %v750
        %v752 = vpop.f32.mrb[0].mxu0
        %753 = vmatprep.mubr.f32.mxu0 0.0
        %754 = vmatmul.mubr.f32.gmra.mrb[0].mxu0 %v296
        %v755 = vpop.f32.mrb[0].mxu0
        %v756 = vadd.f32 %v284, %v755
        %v757 = vpop.f32.mrb[0].mxu0
        %758 = vmatprep.mubr.f32.mxu0 0.0
        %759 = vmatmul.mubr.f32.gmra.mrb[0].mxu0 %v299
        %v760 = vpop.f32.mrb[0].mxu0
        %v761 = vadd.f32 %v284, %v760
        %v762 = vpop.f32.mrb[0].mxu0
        %763 = vmatprep.mubr.f32.mxu0 0.0
        %764 = vmatmul.mubr.f32.gmra.mrb[0].mxu0 %v302
        %v765 = vpop.f32.mrb[0].mxu0
        %v766 = vadd.f32 %v284, %v765
        %v767 = vpop.f32.mrb[0].mxu0
        %768 = vmatprep.mubr.f32.mxu0 0.0
        %769 = vmatmul.mubr.f32.gmra.mrb[0].mxu0 %v305
        %v770 = vpop.f32.mrb[0].mxu0
        %v771 = vadd.f32 %v284, %v770
        %v772 = vpop.f32.mrb[0].mxu0
        %773 = vmatprep.mubr.f32.mxu0 0.0
        %774 = vmatmul.mubr.f32.gmra.mrb[0].mxu0 %v308
        %v775 = vpop.f32.mrb[0].mxu0
        %v776 = vadd.f32 %v284, %v775
        %v777 = vpop.f32.mrb[0].mxu0
        %778 = vmatprep.mubr.f32.mxu0 0.0
        %779 = vmatmul.mubr.f32.gmra.mrb[0].mxu0 %v311
        %v780 = vpop.f32.mrb[0].mxu0
        %v781 = vadd.f32 %v284, %v780
        %v782 = vpop.f32.mrb[0].mxu0
        %783 = vmatprep.mubr.f32.mxu0 0.0
        %784 = vmatmul.mubr.f32.gmra.mrb[0].mxu0 %v314
        %v785 = vpop.f32.mrb[0].mxu0
        %v786 = vadd.f32 %v284, %v785
        %v787 = vpop.f32.mrb[0].mxu0
        %788 = vmatprep.mubr.f32.mxu0 0.0
        %789 = vmatmul.mubr.f32.gmra.mrb[0].mxu0 %v317
        %v790 = vpop.f32.mrb[0].mxu0
        %v791 = vadd.f32 %v284, %v790
        %v792 = vpop.f32.mrb[0].mxu0
        %793 = vmatprep.mubr.f32.mxu0 0.0
        %794 = vmatmul.mubr.f32.gmra.mrb[0].mxu0 %v320
        %v795 = vpop.f32.mrb[0].mxu0
        %v796 = vadd.f32 %v284, %v795
        %v797 = vpop.f32.mrb[0].mxu0
        %798 = vmatprep.mubr.f32.mxu0 0.0
        %799 = vmatmul.mubr.f32.gmra.mrb[0].mxu0 %v323
        %v800 = vpop.f32.mrb[0].mxu0
        %v801 = vadd.f32 %v284, %v800
        %v802 = vpop.f32.mrb[0].mxu0
        %803 = vmatprep.mubr.f32.mxu0 0.0
        %804 = vmatmul.mubr.f32.gmra.mrb[0].mxu0 %v326
        %v805 = vpop.f32.mrb[0].mxu0
        %v806 = vadd.f32 %v284, %v805
        %v807 = vpop.f32.mrb[0].mxu0
        %808 = vmatprep.mubr.f32.mxu0 0.0
        %809 = vmatmul.mubr.f32.gmra.mrb[0].mxu0 %v329
        %v810 = vpop.f32.mrb[0].mxu0
        %v811 = vadd.f32 %v284, %v810
        %v812 = vpop.f32.mrb[0].mxu0
        %813 = vmatprep.mubr.f32.mxu0 0.0
        %814 = vmatmul.mubr.f32.gmra.mrb[0].mxu0 %v332
        %v815 = vpop.f32.mrb[0].mxu0
        %v816 = vadd.f32 %v284, %v815
        %v817 = vpop.f32.mrb[0].mxu0
        %818 = vmatprep.mubr.f32.mxu0 0.0
        %819 = vmatmul.mubr.f32.gmra.mrb[0].mxu0 %v335
        %v820 = vpop.f32.mrb[0].mxu0
        %v821 = vadd.f32 %v284, %v820
        %v822 = vpop.f32.mrb[0].mxu0
        %823 = vmatprep.mubr.f32.mxu0 0.0
        %824 = vmatmul.mubr.f32.gmra.mrb[0].mxu0 %v338
        %v825 = vpop.f32.mrb[0].mxu0
        %v826 = vadd.f32 %v284, %v825
        %v827 = vpop.f32.mrb[0].mxu0
        %828 = vmatprep.mubr.f32.mxu0 0.0
        %829 = vmatmul.mubr.f32.gmra.mrb[0].mxu0 %v341
        %v830 = vpop.f32.mrb[0].mxu0
        %v831 = vadd.f32 %v284, %v830
        %v832 = vpop.f32.mrb[0].mxu0
        %833 = vmatprep.mubr.f32.mxu0 0.0
        %834 = vmatmul.mubr.f32.gmra.mrb[0].mxu0 %v344
        %v835 = vpop.f32.mrb[0].mxu0
        %v836 = vadd.f32 %v284, %v835
        %v837 = vpop.f32.mrb[0].mxu0
        %838 = vmatprep.mubr.f32.mxu0 0.0
        %839 = vmatmul.mubr.f32.gmra.mrb[0].mxu0 %v347
        %v840 = vpop.f32.mrb[0].mxu0
        %v841 = vadd.f32 %v284, %v840
        %v842 = vpop.f32.mrb[0].mxu0
        %843 = vmatprep.mubr.f32.mxu0 0.0
        %844 = vmatmul.mubr.f32.gmra.mrb[0].mxu0 %v350
        %v845 = vpop.f32.mrb[0].mxu0
        %v846 = vadd.f32 %v284, %v845
        %v847 = vpop.f32.mrb[0].mxu0
        %848 = vmatprep.mubr.f32.mxu0 0.0
        %849 = vmatmul.mubr.f32.gmra.mrb[0].mxu0 %v353
        %v850 = vpop.f32.mrb[0].mxu0
        %v851 = vadd.f32 %v284, %v850
        %v852 = vpop.f32.mrb[0].mxu0
        %853 = vmatprep.mubr.f32.mxu0 0.0
        %854 = vmatmul.mubr.f32.gmra.mrb[0].mxu0 %v356
        %v855 = vpop.f32.mrb[0].mxu0
        %v856 = vadd.f32 %v284, %v855
        %v857 = vpop.f32.mrb[0].mxu0
        %858 = vmatprep.mubr.f32.mxu0 0.0
        %859 = vmatmul.mubr.f32.gmra.mrb[0].mxu0 %v359
        %v860 = vpop.f32.mrb[0].mxu0
        %v861 = vadd.f32 %v284, %v860
        %v862 = vpop.f32.mrb[0].mxu0
        %863 = vmatprep.mubr.f32.mxu0 0.0
        %864 = vmatmul.mubr.f32.gmra.mrb[0].mxu0 %v362
        %v865 = vpop.f32.mrb[0].mxu0
        %v866 = vadd.f32 %v284, %v865
        %v867 = vpop.f32.mrb[0].mxu0
        %868 = vmatprep.mubr.f32.mxu0 0.0
        %869 = vmatmul.mubr.f32.gmra.mrb[0].mxu0 %v365
        %v870 = vpop.f32.mrb[0].mxu0
        %v871 = vadd.f32 %v284, %v870
        %v872 = vpop.f32.mrb[0].mxu0
        %873 = vmatprep.mubr.f32.mxu0 0.0
        %874 = vmatmul.mubr.f32.gmra.mrb[0].mxu0 %v368
        %v875 = vpop.f32.mrb[0].mxu0
        %v876 = vadd.f32 %v284, %v875
        %v877 = vpop.f32.mrb[0].mxu0
        %878 = vmatprep.mubr.f32.mxu0 0.0
        %879 = vmatmul.mubr.f32.gmra.mrb[0].mxu0 %v371
        %v880 = vpop.f32.mrb[0].mxu0
        %v881 = vadd.f32 %v284, %v880
        %v882 = vpop.f32.mrb[0].mxu0
        %883 = vmatprep.mubr.f32.mxu0 0.0
        %884 = vmatmul.mubr.f32.gmra.mrb[0].mxu0 %v374
        %v885 = vpop.f32.mrb[0].mxu0
        %v886 = vadd.f32 %v284, %v885
        %v887 = vpop.f32.mrb[0].mxu0
        %888 = vmatprep.mubr.f32.mxu0 0.0
        %889 = vmatmul.mubr.f32.gmra.mrb[0].mxu0 %v377
        %v890 = vpop.f32.mrb[0].mxu0
        %v891 = vadd.f32 %v284, %v890
        %v892 = vpop.f32.mrb[0].mxu0
        %893 = vmatprep.mubr.f32.mxu0 0.0
        %894 = vmatmul.mubr.f32.gmra.mrb[0].mxu0 %v380
        %v895 = vpop.f32.mrb[0].mxu0
        %v896 = vadd.f32 %v284, %v895
        %v897 = vpop.f32.mrb[0].mxu0
        %898 = vmatprep.mubr.f32.mxu0 0.0
        %899 = vmatmul.mubr.f32.gmra.mrb[0].mxu0 %v383
        %v900 = vpop.f32.mrb[0].mxu0
        %v901 = vadd.f32 %v284, %v900
        %v902 = vpop.f32.mrb[0].mxu0
        %903 = vmatprep.mubr.f32.mxu0 0.0
        %904 = vmatmul.mubr.f32.gmra.mrb[0].mxu0 %v386
        %v905 = vpop.f32.mrb[0].mxu0
        %v906 = vadd.f32 %v284, %v905
        %v907 = vpop.f32.mrb[0].mxu0
        %908 = vmatprep.mubr.f32.mxu0 0.0
        %909 = vmatmul.mubr.f32.gmra.mrb[0].mxu0 %v389
        %v910 = vpop.f32.mrb[0].mxu0
        %v911 = vadd.f32 %v284, %v910
        %v912 = vpop.f32.mrb[0].mxu0
        %913 = vmatprep.mubr.f32.mxu0 0.0
        %914 = vmatmul.mubr.f32.gmra.mrb[0].mxu0 %v392
        %v915 = vpop.f32.mrb[0].mxu0
        %v916 = vadd.f32 %v284, %v915
        %v917 = vpop.f32.mrb[0].mxu0
        %918 = vmatprep.mubr.f32.mxu0 0.0
        %919 = vmatmul.mubr.f32.gmra.mrb[0].mxu0 %v395
        %v920 = vpop.f32.mrb[0].mxu0
        %v921 = vadd.f32 %v284, %v920
        %v922 = vpop.f32.mrb[0].mxu0
        %923 = vmatprep.mubr.f32.mxu0 0.0
        %924 = vmatmul.mubr.f32.gmra.mrb[0].mxu0 %v398
        %v925 = vpop.f32.mrb[0].mxu0
        %v926 = vadd.f32 %v284, %v925
        %v927 = vpop.f32.mrb[0].mxu0
        %928 = vmatprep.mubr.f32.mxu0 0.0
        %929 = vmatmul.mubr.f32.gmra.mrb[0].mxu0 %v401
        %v930 = vpop.f32.mrb[0].mxu0
        %v931 = vadd.f32 %v284, %v930
        %v932 = vpop.f32.mrb[0].mxu0
        %933 = vmatprep.mubr.f32.mxu0 0.0
        %934 = vmatmul.mubr.f32.gmra.mrb[0].mxu0 %v404
        %v935 = vpop.f32.mrb[0].mxu0
        %v936 = vadd.f32 %v284, %v935
        %v937 = vpop.f32.mrb[0].mxu0
        %938 = vmatprep.mubr.f32.mxu0 0.0
        %939 = vmatmul.mubr.f32.gmra.mrb[0].mxu0 %v407
        %v940 = vpop.f32.mrb[0].mxu0
        %v941 = vadd.f32 %v284, %v940
        %v942 = vpop.f32.mrb[0].mxu0
        %943 = vmatprep.mubr.f32.mxu0 0.0
        %944 = vmatmul.mubr.f32.gmra.mrb[0].mxu0 %v410
        %v945 = vpop.f32.mrb[0].mxu0
        %v946 = vadd.f32 %v284, %v945
        %v947 = vpop.f32.mrb[0].mxu0
        %948 = vmatprep.mubr.f32.mxu0 0.0
        %949 = vmatmul.mubr.f32.gmra.mrb[0].mxu0 %v413
        %v950 = vpop.f32.mrb[0].mxu0
        %v951 = vadd.f32 %v284, %v950
        %v952 = vpop.f32.mrb[0].mxu0
        %953 = vmatprep.mubr.f32.mxu0 0.0
        %954 = vmatmul.mubr.f32.gmra.mrb[0].mxu0 %v416
        %v955 = vpop.f32.mrb[0].mxu0
        %v956 = vadd.f32 %v284, %v955
        %v957 = vpop.f32.mrb[0].mxu0
        %958 = vmatprep.mubr.f32.mxu0 0.0
        %959 = vmatmul.mubr.f32.gmra.mrb[0].mxu0 %v419
        %v960 = vpop.f32.mrb[0].mxu0
        %v961 = vadd.f32 %v284, %v960
        %v962 = vpop.f32.mrb[0].mxu0
        %963 = vmatprep.mubr.f32.mxu0 0.0
        %964 = vmatmul.mubr.f32.gmra.mrb[0].mxu0 %v422
        %v965 = vpop.f32.mrb[0].mxu0
        %v966 = vadd.f32 %v284, %v965
        %v967 = vpop.f32.mrb[0].mxu0
        %968 = vmatprep.mubr.f32.mxu0 0.0
        %969 = vmatmul.mubr.f32.gmra.mrb[0].mxu0 %v425
        %v970 = vpop.f32.mrb[0].mxu0
        %v971 = vadd.f32 %v284, %v970
        %v972 = vpop.f32.mrb[0].mxu0
        %973 = vmatprep.mubr.f32.mxu0 0.0
        %974 = vmatmul.mubr.f32.gmra.mrb[0].mxu0 %v428
        %v975 = vpop.f32.mrb[0].mxu0
        %v976 = vadd.f32 %v284, %v975
        %v977 = vpop.f32.mrb[0].mxu0
        %978 = vmatprep.mubr.f32.mxu0 0.0
        %979 = vmatmul.mubr.f32.gmra.mrb[0].mxu0 %v431
        %v980 = vpop.f32.mrb[0].mxu0
        %v981 = vadd.f32 %v284, %v980
        %v982 = vpop.f32.mrb[0].mxu0
        %983 = vmatprep.mubr.f32.mxu0 0.0
        %984 = vmatmul.mubr.f32.gmra.mrb[0].mxu0 %v434
        %v985 = vpop.f32.mrb[0].mxu0
        %v986 = vadd.f32 %v284, %v985
        %v987 = vpop.f32.mrb[0].mxu0
        %988 = vmatprep.mubr.f32.mxu0 0.0
        %989 = vmatmul.mubr.f32.gmra.mrb[0].mxu0 %v437
        %v990 = vpop.f32.mrb[0].mxu0
        %v991 = vadd.f32 %v284, %v990
        %v992 = vpop.f32.mrb[0].mxu0
        %993 = vmatprep.mubr.f32.mxu0 0.0
        %994 = vmatmul.mubr.f32.gmra.mrb[0].mxu0 %v440
        %v995 = vpop.f32.mrb[0].mxu0
        %v996 = vadd.f32 %v284, %v995
        %v997 = vpop.f32.mrb[0].mxu0
        %998 = vmatprep.mubr.f32.mxu0 0.0
        %999 = vmatmul.mubr.f32.gmra.mrb[0].mxu0 %v443
        %v1000 = vpop.f32.mrb[0].mxu0
        %v1001 = vadd.f32 %v284, %v1000
        %v1002 = vpop.f32.mrb[0].mxu0
        %1003 = vmatprep.mubr.f32.mxu0 0.0
        %1004 = vmatmul.mubr.f32.gmra.mrb[0].mxu0 %v446
        %v1005 = vpop.f32.mrb[0].mxu0
        %v1006 = vadd.f32 %v284, %v1005
        %v1007 = vpop.f32.mrb[0].mxu0
        %1008 = vmatprep.mubr.f32.mxu0 0.0
        %1009 = vmatmul.mubr.f32.gmra.mrb[0].mxu0 %v449
        %v1010 = vpop.f32.mrb[0].mxu0
        %v1011 = vadd.f32 %v284, %v1010
        %v1012 = vpop.f32.mrb[0].mxu0
        %1013 = vmatprep.mubr.f32.mxu0 0.0
        %1014 = vmatmul.mubr.f32.gmra.mrb[0].mxu0 %v452
        %v1015 = vpop.f32.mrb[0].mxu0
        %v1016 = vadd.f32 %v284, %v1015
        %v1017 = vpop.f32.mrb[0].mxu0
        %1018 = vmatprep.mubr.f32.mxu0 0.0
        %1019 = vmatmul.mubr.f32.gmra.mrb[0].mxu0 %v455
        %v1020 = vpop.f32.mrb[0].mxu0
        %v1021 = vadd.f32 %v284, %v1020
        %v1022 = vpop.f32.mrb[0].mxu0
        %1023 = vmatprep.mubr.f32.mxu0 0.0
        %1024 = vmatmul.mubr.f32.gmra.mrb[0].mxu0 %v458
        %v1025 = vpop.f32.mrb[0].mxu0
        %v1026 = vadd.f32 %v284, %v1025
        %v1027 = vpop.f32.mrb[0].mxu0
        %1028 = vmatprep.mubr.f32.mxu0 0.0
        %1029 = vmatmul.mubr.f32.gmra.mrb[0].mxu0 %v461
        %v1030 = vpop.f32.mrb[0].mxu0
        %v1031 = vadd.f32 %v284, %v1030
        %v1032 = vpop.f32.mrb[0].mxu0
        %1033 = vmatprep.mubr.f32.mxu0 0.0
        %1034 = vmatmul.mubr.f32.gmra.mrb[0].mxu0 %v464
        %v1035 = vpop.f32.mrb[0].mxu0
        %v1036 = vadd.f32 %v284, %v1035
        %v1037 = vpop.f32.mrb[0].mxu0
        %1038 = vmatprep.mubr.f32.mxu0 0.0
        %1039 = vmatmul.mubr.f32.gmra.mrb[0].mxu0 %v467
        %v1040 = vpop.f32.mrb[0].mxu0
        %v1041 = vadd.f32 %v284, %v1040
        %v1042 = vpop.f32.mrb[0].mxu0
        %1043 = vmatprep.mubr.f32.mxu0 0.0
        %1044 = vmatmul.mubr.f32.gmra.mrb[0].mxu0 %v470
        %v1045 = vpop.f32.mrb[0].mxu0
        %v1046 = vadd.f32 %v284, %v1045
        %v1047 = vpop.f32.mrb[0].mxu0
        %1048 = vmatprep.mubr.f32.mxu0 0.0
        %1049 = vmatmul.mubr.f32.gmra.mrb[0].mxu0 %v473
        %v1050 = vpop.f32.mrb[0].mxu0
        %v1051 = vadd.f32 %v284, %v1050
        %v1052 = vpop.f32.mrb[0].mxu0
        %1053 = vmatprep.mubr.f32.mxu0 0.0
        %1054 = vmatmul.mubr.f32.gmra.mrb[0].mxu0 %v476
        %v1055 = vpop.f32.mrb[0].mxu0
        %v1056 = vadd.f32 %v284, %v1055
        %v1057 = vpop.f32.mrb[0].mxu0
        %1058 = vmatprep.mubr.f32.mxu0 0.0
        %1059 = vmatmul.mubr.f32.gmra.mrb[0].mxu0 %v479
        %v1060 = vpop.f32.mrb[0].mxu0
        %v1061 = vadd.f32 %v284, %v1060
        %v1062 = vpop.f32.mrb[0].mxu0
        %1063 = vmatprep.mubr.f32.mxu0 0.0
        %1064 = vmatmul.mubr.f32.gmra.mrb[0].mxu0 %v482
        %v1065 = vpop.f32.mrb[0].mxu0
        %v1066 = vadd.f32 %v284, %v1065
        %v1067 = vpop.f32.mrb[0].mxu0
        %1068 = vmatprep.mubr.f32.mxu0 0.0
        %1069 = vmatmul.mubr.f32.gmra.mrb[0].mxu0 %v485
        %v1070 = vpop.f32.mrb[0].mxu0
        %v1071 = vadd.f32 %v284, %v1070
        %v1072 = vpop.f32.mrb[0].mxu0
        %1073 = vmatprep.mubr.f32.mxu0 0.0
        %1074 = vmatmul.mubr.f32.gmra.mrb[0].mxu0 %v488
        %v1075 = vpop.f32.mrb[0].mxu0
        %v1076 = vadd.f32 %v284, %v1075
        %v1077 = vpop.f32.mrb[0].mxu0
        %1078 = vmatprep.mubr.f32.mxu0 0.0
        %1079 = vmatmul.mubr.f32.gmra.mrb[0].mxu0 %v491
        %v1080 = vpop.f32.mrb[0].mxu0
        %v1081 = vadd.f32 %v284, %v1080
        %v1082 = vpop.f32.mrb[0].mxu0
        %1083 = vmatprep.mubr.f32.mxu0 0.0
        %1084 = vmatmul.mubr.f32.gmra.mrb[0].mxu0 %v494
        %v1085 = vpop.f32.mrb[0].mxu0
        %v1086 = vadd.f32 %v284, %v1085
        %v1087 = vpop.f32.mrb[0].mxu0
        %1088 = vmatprep.mubr.f32.mxu0 0.0
        %1089 = vmatmul.mubr.f32.gmra.mrb[0].mxu0 %v497
        %v1090 = vpop.f32.mrb[0].mxu0
        %v1091 = vadd.f32 %v284, %v1090
        %v1092 = vpop.f32.mrb[0].mxu0
        %1093 = vmatprep.mubr.f32.mxu0 0.0
        %1094 = vmatmul.mubr.f32.gmra.mrb[0].mxu0 %v500
        %v1095 = vpop.f32.mrb[0].mxu0
        %v1096 = vadd.f32 %v284, %v1095
        %v1097 = vpop.f32.mrb[0].mxu0
        %1098 = vmatprep.mubr.f32.mxu0 0.0
        %1099 = vmatmul.mubr.f32.gmra.mrb[0].mxu0 %v503
        %v1100 = vpop.f32.mrb[0].mxu0
        %v1101 = vadd.f32 %v284, %v1100
        %v1102 = vpop.f32.mrb[0].mxu0
        %1103 = vmatprep.mubr.f32.mxu0 0.0
        %1104 = vmatmul.mubr.f32.gmra.mrb[0].mxu0 %v506
        %v1105 = vpop.f32.mrb[0].mxu0
        %v1106 = vadd.f32 %v284, %v1105
        %v1107 = vpop.f32.mrb[0].mxu0
        %1108 = vmatprep.mubr.f32.mxu0 0.0
        %1109 = vmatmul.mubr.f32.gmra.mrb[0].mxu0 %v509
        %v1110 = vpop.f32.mrb[0].mxu0
        %v1111 = vadd.f32 %v284, %v1110
        %v1112 = vpop.f32.mrb[0].mxu0
        %1113 = vmatprep.mubr.f32.mxu0 0.0
        %1114 = vmatmul.mubr.f32.gmra.mrb[0].mxu0 %v512
        %v1115 = vpop.f32.mrb[0].mxu0
        %v1116 = vadd.f32 %v284, %v1115
        %v1117 = vpop.f32.mrb[0].mxu0
        %1118 = vmatprep.mubr.f32.mxu0 0.0
        %1119 = vmatmul.mubr.f32.gmra.mrb[0].mxu0 %v515
        %v1120 = vpop.f32.mrb[0].mxu0
        %v1121 = vadd.f32 %v284, %v1120
        %v1122 = vpop.f32.mrb[0].mxu0
        %1123 = vmatprep.mubr.f32.mxu0 0.0
        %1124 = vmatmul.mubr.f32.gmra.mrb[0].mxu0 %v518
        %v1125 = vpop.f32.mrb[0].mxu0
        %v1126 = vadd.f32 %v284, %v1125
        %v1127 = vpop.f32.mrb[0].mxu0
        %1128 = vmatprep.mubr.f32.mxu0 0.0
        %1129 = vmatmul.mubr.f32.gmra.mrb[0].mxu0 %v521
        %v1130 = vpop.f32.mrb[0].mxu0
        %v1131 = vadd.f32 %v284, %v1130
        %v1132 = vpop.f32.mrb[0].mxu0
        %1133 = vmatprep.mubr.f32.mxu0 0.0
        %1134 = vmatmul.mubr.f32.gmra.mrb[0].mxu0 %v524
        %v1135 = vpop.f32.mrb[0].mxu0
        %v1136 = vadd.f32 %v284, %v1135
        %v1137 = vpop.f32.mrb[0].mxu0
        %1138 = vmatprep.mubr.f32.mxu0 0.0
        %1139 = vmatmul.mubr.f32.gmra.mrb[0].mxu0 %v527
        %v1140 = vpop.f32.mrb[0].mxu0
        %v1141 = vadd.f32 %v284, %v1140
        %v1142 = vpop.f32.mrb[0].mxu0
        %1143 = vmatprep.mubr.f32.mxu0 0.0
        %1144 = vmatmul.mubr.f32.gmra.mrb[0].mxu0 %v530
        %v1145 = vpop.f32.mrb[0].mxu0
        %v1146 = vadd.f32 %v284, %v1145
        %v1147 = vpop.f32.mrb[0].mxu0
        %1148 = vmatprep.mubr.f32.mxu0 0.0
        %1149 = vmatmul.mubr.f32.gmra.mrb[0].mxu0 %v533
        %v1150 = vpop.f32.mrb[0].mxu0
        %v1151 = vadd.f32 %v284, %v1150
        %v1152 = vpop.f32.mrb[0].mxu0
        %1153 = vmatprep.mubr.f32.mxu0 0.0
        %1154 = vmatmul.mubr.f32.gmra.mrb[0].mxu0 %v536
        %v1155 = vpop.f32.mrb[0].mxu0
        %v1156 = vadd.f32 %v284, %v1155
        %v1157 = vpop.f32.mrb[0].mxu0
        %1158 = vmatprep.mubr.f32.mxu0 0.0
        %1159 = vmatmul.mubr.f32.gmra.mrb[0].mxu0 %v539
        %v1160 = vpop.f32.mrb[0].mxu0
        %v1161 = vadd.f32 %v284, %v1160
        %v1162 = vpop.f32.mrb[0].mxu0
        %1163 = vmatprep.mubr.f32.mxu0 0.0
        %1164 = vmatmul.mubr.f32.gmra.mrb[0].mxu0 %v542
        %v1165 = vpop.f32.mrb[0].mxu0
        %v1166 = vadd.f32 %v284, %v1165
        %v1167 = vpop.f32.mrb[0].mxu0
        %1168 = vmatprep.mubr.f32.mxu0 0.0
        %1169 = vmatmul.mubr.f32.gmra.mrb[0].mxu0 %v545
        %v1170 = vpop.f32.mrb[0].mxu0
        %v1171 = vadd.f32 %v284, %v1170
        %v1172 = vpop.f32.mrb[0].mxu0
        %1173 = vmatprep.mubr.f32.mxu0 0.0
        %1174 = vmatmul.mubr.f32.gmra.mrb[0].mxu0 %v548
        %v1175 = vpop.f32.mrb[0].mxu0
        %v1176 = vadd.f32 %v284, %v1175
        %v1177 = vpop.f32.mrb[0].mxu0
        %1178 = vmatprep.mubr.f32.mxu0 0.0
        %1179 = vmatmul.mubr.f32.gmra.mrb[0].mxu0 %v551
        %v1180 = vpop.f32.mrb[0].mxu0
        %v1181 = vadd.f32 %v284, %v1180
        %v1182 = vpop.f32.mrb[0].mxu0
        %1183 = vmatprep.mubr.f32.mxu0 0.0
        %1184 = vmatmul.mubr.f32.gmra.mrb[0].mxu0 %v554
        %v1185 = vpop.f32.mrb[0].mxu0
        %v1186 = vadd.f32 %v284, %v1185
        %v1187 = vpop.f32.mrb[0].mxu0
        %1188 = vmatprep.mubr.f32.mxu0 0.0
        %1189 = vmatmul.mubr.f32.gmra.mrb[0].mxu0 %v557
        %v1190 = vpop.f32.mrb[0].mxu0
        %v1191 = vadd.f32 %v284, %v1190
        %v1192 = vpop.f32.mrb[0].mxu0
        %1193 = vmatprep.mubr.f32.mxu0 0.0
        %1194 = vmatmul.mubr.f32.gmra.mrb[0].mxu0 %v560
        %v1195 = vpop.f32.mrb[0].mxu0
        %v1196 = vadd.f32 %v284, %v1195
        %v1197 = vpop.f32.mrb[0].mxu0
        %1198 = vmatprep.mubr.f32.mxu0 0.0
        %1199 = vmatmul.mubr.f32.gmra.mrb[0].mxu0 %v563
        %v1200 = vpop.f32.mrb[0].mxu0
        %v1201 = vadd.f32 %v284, %v1200
        %v1202 = vpop.f32.mrb[0].mxu0
        %1203 = vmatprep.mubr.f32.mxu0 0.0
        %1204 = vmatmul.mubr.f32.gmra.mrb[0].mxu0 %v566
        %v1205 = vpop.f32.mrb[0].mxu0
        %v1206 = vadd.f32 %v284, %v1205
        %v1207 = vpop.f32.mrb[0].mxu0
        %1208 = vmatprep.mubr.f32.mxu0 0.0
        %1209 = vmatmul.mubr.f32.gmra.mrb[0].mxu0 %v569
        %v1210 = vpop.f32.mrb[0].mxu0
        %v1211 = vadd.f32 %v284, %v1210
        %v1212 = vpop.f32.mrb[0].mxu0
        %1213 = vmatprep.mubr.f32.mxu0 0.0
        %1214 = vmatmul.mubr.f32.gmra.mrb[0].mxu0 %v572
        %v1215 = vpop.f32.mrb[0].mxu0
        %v1216 = vadd.f32 %v284, %v1215
        %v1217 = vpop.f32.mrb[0].mxu0
        %1218 = vmatprep.mubr.f32.mxu0 0.0
        %1219 = vmatmul.mubr.f32.gmra.mrb[0].mxu0 %v575
        %v1220 = vpop.f32.mrb[0].mxu0
        %v1221 = vadd.f32 %v284, %v1220
        %v1222 = vpop.f32.mrb[0].mxu0
        %1223 = vmatprep.mubr.f32.mxu0 0.0
        %1224 = vmatmul.mubr.f32.gmra.mrb[0].mxu0 %v578
        %v1225 = vpop.f32.mrb[0].mxu0
        %v1226 = vadd.f32 %v284, %v1225
        %v1227 = vpop.f32.mrb[0].mxu0
        %1228 = vmatprep.mubr.f32.mxu0 0.0
        %1229 = vmatmul.mubr.f32.gmra.mrb[0].mxu0 %v581
        %v1230 = vpop.f32.mrb[0].mxu0
        %v1231 = vadd.f32 %v284, %v1230
        %v1232 = vpop.f32.mrb[0].mxu0
        %1233 = vmatprep.mubr.f32.mxu0 0.0
        %1234 = vmatmul.mubr.f32.gmra.mrb[0].mxu0 %v584
        %v1235 = vpop.f32.mrb[0].mxu0
        %v1236 = vadd.f32 %v284, %v1235
        %v1237 = vpop.f32.mrb[0].mxu0
        %1238 = vmatprep.mubr.f32.mxu0 0.0
        %1239 = vmatmul.mubr.f32.gmra.mrb[0].mxu0 %v587
        %v1240 = vpop.f32.mrb[0].mxu0
        %v1241 = vadd.f32 %v284, %v1240
        %v1242 = vpop.f32.mrb[0].mxu0
        %1243 = vmatprep.mubr.f32.mxu0 0.0
        %1244 = vmatmul.mubr.f32.gmra.mrb[0].mxu0 %v590
        %v1245 = vpop.f32.mrb[0].mxu0
        %v1246 = vadd.f32 %v284, %v1245
        %v1247 = vpop.f32.mrb[0].mxu0
        %1248 = vmatprep.mubr.f32.mxu0 0.0
        %1249 = vmatmul.mubr.f32.gmra.mrb[0].mxu0 %v593
        %v1250 = vpop.f32.mrb[0].mxu0
        %v1251 = vadd.f32 %v284, %v1250
        %v1252 = vpop.f32.mrb[0].mxu0
        %1253 = vmatprep.mubr.f32.mxu0 0.0
        %1254 = vmatmul.mubr.f32.gmra.mrb[0].mxu0 %v596
        %v1255 = vpop.f32.mrb[0].mxu0
        %v1256 = vadd.f32 %v284, %v1255
        %v1257 = vpop.f32.mrb[0].mxu0
        %1258 = vmatprep.mubr.f32.mxu0 0.0
        %1259 = vmatmul.mubr.f32.gmra.mrb[0].mxu0 %v599
        %v1260 = vpop.f32.mrb[0].mxu0
        %v1261 = vadd.f32 %v284, %v1260
        %v1262 = vpop.f32.mrb[0].mxu0
        %1263 = vmatprep.mubr.f32.mxu0 0.0
        %1264 = vmatmul.mubr.f32.gmra.mrb[0].mxu0 %v602
        %v1265 = vpop.f32.mrb[0].mxu0
        %v1266 = vadd.f32 %v284, %v1265
        %v1267 = vpop.f32.mrb[0].mxu0
        %1268 = vmatprep.mubr.f32.mxu0 0.0
        %1269 = vmatmul.mubr.f32.gmra.mrb[0].mxu0 %v605
        %v1270 = vpop.f32.mrb[0].mxu0
        %v1271 = vadd.f32 %v284, %v1270
        %v1272 = vpop.f32.mrb[0].mxu0
        %1273 = vmatprep.mubr.f32.mxu0 0.0
        %1274 = vmatmul.mubr.f32.gmra.mrb[0].mxu0 %v608
        %v1275 = vpop.f32.mrb[0].mxu0
        %v1276 = vadd.f32 %v284, %v1275
        %v1277 = vpop.f32.mrb[0].mxu0
        %1278 = vmatprep.mubr.f32.mxu0 0.0
        %1279 = vmatmul.mubr.f32.gmra.mrb[0].mxu0 %v611
        %v1280 = vpop.f32.mrb[0].mxu0
        %v1281 = vadd.f32 %v284, %v1280
        %v1282 = vpop.f32.mrb[0].mxu0
        %1283 = vmatprep.mubr.f32.mxu0 0.0
        %1284 = vmatmul.mubr.f32.gmra.mrb[0].mxu0 %v614
        %v1285 = vpop.f32.mrb[0].mxu0
        %v1286 = vadd.f32 %v284, %v1285
        %v1287 = vpop.f32.mrb[0].mxu0
        %1288 = vmatprep.mubr.f32.mxu0 0.0
        %1289 = vmatmul.mubr.f32.gmra.mrb[0].mxu0 %v617
        %v1290 = vpop.f32.mrb[0].mxu0
        %v1291 = vadd.f32 %v284, %v1290
        %v1292 = vpop.f32.mrb[0].mxu0
        %1293 = vmatprep.mubr.f32.mxu0 0.0
        %1294 = vmatmul.mubr.f32.gmra.mrb[0].mxu0 %v620
        %v1295 = vpop.f32.mrb[0].mxu0
        %v1296 = vadd.f32 %v284, %v1295
        %v1297 = vpop.f32.mrb[0].mxu0
        %1298 = vmatprep.mubr.f32.mxu0 0.0
        %1299 = vmatmul.mubr.f32.gmra.mrb[0].mxu0 %v623
        %v1300 = vpop.f32.mrb[0].mxu0
        %v1301 = vadd.f32 %v284, %v1300
        %v1302 = vpop.f32.mrb[0].mxu0
        %1303 = vmatprep.mubr.f32.mxu0 0.0
        %1304 = vmatmul.mubr.f32.gmra.mrb[0].mxu0 %v626
        %v1305 = vpop.f32.mrb[0].mxu0
        %v1306 = vadd.f32 %v284, %v1305
        %v1307 = vpop.f32.mrb[0].mxu0
        %1308 = vmatprep.mubr.f32.mxu0 0.0
        %1309 = vmatmul.mubr.f32.gmra.mrb[0].mxu0 %v629
        %v1310 = vpop.f32.mrb[0].mxu0
        %v1311 = vadd.f32 %v284, %v1310
        %v1312 = vpop.f32.mrb[0].mxu0
        %1313 = vmatprep.mubr.f32.mxu0 0.0
        %1314 = vmatmul.mubr.f32.gmra.mrb[0].mxu0 %v632
        %v1315 = vpop.f32.mrb[0].mxu0
        %v1316 = vadd.f32 %v284, %v1315
        %v1317 = vpop.f32.mrb[0].mxu0
        %1318 = vmatprep.mubr.f32.mxu0 0.0
        %1319 = vmatmul.mubr.f32.gmra.mrb[0].mxu0 %v635
        %v1320 = vpop.f32.mrb[0].mxu0
        %v1321 = vadd.f32 %v284, %v1320
        %v1322 = vpop.f32.mrb[0].mxu0
        %1323 = vmatprep.mubr.f32.mxu0 0.0
        %1324 = vmatmul.mubr.f32.gmra.mrb[0].mxu0 %v638
        %v1325 = vpop.f32.mrb[0].mxu0
        %v1326 = vadd.f32 %v284, %v1325
        %v1327 = vpop.f32.mrb[0].mxu0
        %1328 = vmatprep.mubr.f32.mxu0 0.0
        %1329 = vmatmul.mubr.f32.gmra.mrb[0].mxu0 %v641
        %v1330 = vpop.f32.mrb[0].mxu0
        %v1331 = vadd.f32 %v284, %v1330
        %v1332 = vpop.f32.mrb[0].mxu0
        %1333 = vmatprep.mubr.f32.mxu0 0.0
        %1334 = vmatmul.mubr.f32.gmra.mrb[0].mxu0 %v644
        %v1335 = vpop.f32.mrb[0].mxu0
        %v1336 = vadd.f32 %v284, %v1335
        %v1337 = vpop.f32.mrb[0].mxu0
        %1338 = vmatprep.mubr.f32.mxu0 0.0
        %1339 = vmatmul.mubr.f32.gmra.mrb[0].mxu0 %v647
        %v1340 = vpop.f32.mrb[0].mxu0
        %v1341 = vadd.f32 %v284, %v1340
        %v1342 = vpop.f32.mrb[0].mxu0
        %1343 = vmatprep.mubr.f32.mxu0 0.0
        %1344 = vmatmul.mubr.f32.gmra.mrb[0].mxu0 %v650
        %v1345 = vpop.f32.mrb[0].mxu0
        %v1346 = vadd.f32 %v284, %v1345
        %v1347 = vpop.f32.mrb[0].mxu0
        %1348 = vmatprep.mubr.f32.mxu0 0.0
        %1349 = vmatmul.mubr.f32.gmra.mrb[0].mxu0 %v653
        %v1350 = vpop.f32.mrb[0].mxu0
        %v1351 = vadd.f32 %v284, %v1350
        %v1352 = vpop.f32.mrb[0].mxu0
        %1353 = vmatprep.mubr.f32.mxu0 0.0
        %1354 = vmatmul.mubr.f32.gmra.mrb[0].mxu0 %v656
        %v1355 = vpop.f32.mrb[0].mxu0
        %v1356 = vadd.f32 %v284, %v1355
        %v1357 = vpop.f32.mrb[0].mxu0
        %1358 = vmatprep.mubr.f32.mxu0 0.0
        %1359 = vmatmul.mubr.f32.gmra.mrb[0].mxu0 %v659
        %v1360 = vpop.f32.mrb[0].mxu0
        %v1361 = vadd.f32 %v284, %v1360
        %v1362 = vpop.f32.mrb[0].mxu0
        %1363 = vmatprep.mubr.f32.mxu0 0.0
        %1364 = vmatmul.mubr.f32.gmra.mrb[0].mxu0 %v662
        %v1365 = vpop.f32.mrb[0].mxu0
        %v1366 = vadd.f32 %v284, %v1365
        %v1367 = vpop.f32.mrb[0].mxu0
        %1368 = vmatprep.mubr.f32.mxu0 0.0
        %1369 = vmatmul.mubr.f32.gmra.mrb[0].mxu0 %v665
        %v1370 = vpop.f32.mrb[0].mxu0
        %v1371 = vadd.f32 %v284, %v1370
        %v1372 = vpop.f32.mrb[0].mxu0
        %1373 = vmatprep.mubr.f32.mxu0 0.0
        %1374 = vmatmul.mubr.f32.gmra.mrb[0].mxu0 %v668
        %v1375 = vpop.f32.mrb[0].mxu0
        %v1376 = vadd.f32 %v284, %v1375
        %v1377 = vpop.f32.mrb[0].mxu0
        %1378 = vdwg.mxu0
        %v1379 = vmax.f32 %v741, 0.0
        %v1380 = vmax.f32 %v746, 0.0
        %v1381 = vmax.f32 %v751, 0.0
        %v1382 = vmax.f32 %v756, 0.0
        %v1383 = vmax.f32 %v761, 0.0
        %v1384 = vmax.f32 %v766, 0.0
        %v1385 = vmax.f32 %v771, 0.0
        %v1386 = vmax.f32 %v776, 0.0
        %v1387 = vmax.f32 %v781, 0.0
        %v1388 = vmax.f32 %v786, 0.0
        %v1389 = vmax.f32 %v791, 0.0
        %v1390 = vmax.f32 %v796, 0.0
        %v1391 = vmax.f32 %v801, 0.0
        %v1392 = vmax.f32 %v806, 0.0
        %v1393 = vmax.f32 %v811, 0.0
        %v1394 = vmax.f32 %v816, 0.0
        %v1395 = vmax.f32 %v821, 0.0
        %v1396 = vmax.f32 %v826, 0.0
        %v1397 = vmax.f32 %v831, 0.0
        %v1398 = vmax.f32 %v836, 0.0
        %v1399 = vmax.f32 %v841, 0.0
        %v1400 = vmax.f32 %v846, 0.0
        %v1401 = vmax.f32 %v851, 0.0
        %v1402 = vmax.f32 %v856, 0.0
        %v1403 = vmax.f32 %v861, 0.0
        %v1404 = vmax.f32 %v866, 0.0
        %v1405 = vmax.f32 %v871, 0.0
        %v1406 = vmax.f32 %v876, 0.0
        %v1407 = vmax.f32 %v881, 0.0
        %v1408 = vmax.f32 %v886, 0.0
        %v1409 = vmax.f32 %v891, 0.0
        %v1410 = vmax.f32 %v896, 0.0
        %v1411 = vmax.f32 %v901, 0.0
        %v1412 = vmax.f32 %v906, 0.0
        %v1413 = vmax.f32 %v911, 0.0
        %v1414 = vmax.f32 %v916, 0.0
        %v1415 = vmax.f32 %v921, 0.0
        %v1416 = vmax.f32 %v926, 0.0
        %v1417 = vmax.f32 %v931, 0.0
        %v1418 = vmax.f32 %v936, 0.0
        %v1419 = vmax.f32 %v941, 0.0
        %v1420 = vmax.f32 %v946, 0.0
        %v1421 = vmax.f32 %v951, 0.0
        %v1422 = vmax.f32 %v956, 0.0
        %v1423 = vmax.f32 %v961, 0.0
        %v1424 = vmax.f32 %v966, 0.0
        %v1425 = vmax.f32 %v971, 0.0
        %v1426 = vmax.f32 %v976, 0.0
        %v1427 = vmax.f32 %v981, 0.0
        %v1428 = vmax.f32 %v986, 0.0
        %v1429 = vmax.f32 %v991, 0.0
        %v1430 = vmax.f32 %v996, 0.0
        %v1431 = vmax.f32 %v1001, 0.0
        %v1432 = vmax.f32 %v1006, 0.0
        %v1433 = vmax.f32 %v1011, 0.0
        %v1434 = vmax.f32 %v1016, 0.0
        %v1435 = vmax.f32 %v1021, 0.0
        %v1436 = vmax.f32 %v1026, 0.0
        %v1437 = vmax.f32 %v1031, 0.0
        %v1438 = vmax.f32 %v1036, 0.0
        %v1439 = vmax.f32 %v1041, 0.0
        %v1440 = vmax.f32 %v1046, 0.0
        %v1441 = vmax.f32 %v1051, 0.0
        %v1442 = vmax.f32 %v1056, 0.0
        %v1443 = vmax.f32 %v1061, 0.0
        %v1444 = vmax.f32 %v1066, 0.0
        %v1445 = vmax.f32 %v1071, 0.0
        %v1446 = vmax.f32 %v1076, 0.0
        %v1447 = vmax.f32 %v1081, 0.0
        %v1448 = vmax.f32 %v1086, 0.0
        %v1449 = vmax.f32 %v1091, 0.0
        %v1450 = vmax.f32 %v1096, 0.0
        %v1451 = vmax.f32 %v1101, 0.0
        %v1452 = vmax.f32 %v1106, 0.0
        %v1453 = vmax.f32 %v1111, 0.0
        %v1454 = vmax.f32 %v1116, 0.0
        %v1455 = vmax.f32 %v1121, 0.0
        %v1456 = vmax.f32 %v1126, 0.0
        %v1457 = vmax.f32 %v1131, 0.0
        %v1458 = vmax.f32 %v1136, 0.0
        %v1459 = vmax.f32 %v1141, 0.0
        %v1460 = vmax.f32 %v1146, 0.0
        %v1461 = vmax.f32 %v1151, 0.0
        %v1462 = vmax.f32 %v1156, 0.0
        %v1463 = vmax.f32 %v1161, 0.0
        %v1464 = vmax.f32 %v1166, 0.0
        %v1465 = vmax.f32 %v1171, 0.0
        %v1466 = vmax.f32 %v1176, 0.0
        %v1467 = vmax.f32 %v1181, 0.0
        %v1468 = vmax.f32 %v1186, 0.0
        %v1469 = vmax.f32 %v1191, 0.0
        %v1470 = vmax.f32 %v1196, 0.0
        %v1471 = vmax.f32 %v1201, 0.0
        %v1472 = vmax.f32 %v1206, 0.0
        %v1473 = vmax.f32 %v1211, 0.0
        %v1474 = vmax.f32 %v1216, 0.0
        %v1475 = vmax.f32 %v1221, 0.0
        %v1476 = vmax.f32 %v1226, 0.0
        %v1477 = vmax.f32 %v1231, 0.0
        %v1478 = vmax.f32 %v1236, 0.0
        %v1479 = vmax.f32 %v1241, 0.0
        %v1480 = vmax.f32 %v1246, 0.0
        %v1481 = vmax.f32 %v1251, 0.0
        %v1482 = vmax.f32 %v1256, 0.0
        %v1483 = vmax.f32 %v1261, 0.0
        %v1484 = vmax.f32 %v1266, 0.0
        %v1485 = vmax.f32 %v1271, 0.0
        %v1486 = vmax.f32 %v1276, 0.0
        %v1487 = vmax.f32 %v1281, 0.0
        %v1488 = vmax.f32 %v1286, 0.0
        %v1489 = vmax.f32 %v1291, 0.0
        %v1490 = vmax.f32 %v1296, 0.0
        %v1491 = vmax.f32 %v1301, 0.0
        %v1492 = vmax.f32 %v1306, 0.0
        %v1493 = vmax.f32 %v1311, 0.0
        %v1494 = vmax.f32 %v1316, 0.0
        %v1495 = vmax.f32 %v1321, 0.0
        %v1496 = vmax.f32 %v1326, 0.0
        %v1497 = vmax.f32 %v1331, 0.0
        %v1498 = vmax.f32 %v1336, 0.0
        %v1499 = vmax.f32 %v1341, 0.0
        %v1500 = vmax.f32 %v1346, 0.0
        %v1501 = vmax.f32 %v1351, 0.0
        %v1502 = vmax.f32 %v1356, 0.0
        %v1503 = vmax.f32 %v1361, 0.0
        %v1504 = vmax.f32 %v1366, 0.0
        %v1505 = vmax.f32 %v1371, 0.0
        %v1506 = vmax.f32 %v1376, 0.0
        %v1507 = vlaneseq
        %v1508 = vshrl.u32 %v1507, 7
        %v1509 = vsub.s32 0, %v1508
        %v1510 = vrot.slane %v279, %v1509
        %vm1511 = vcmask 121856
        %v1513 = vsel %vm1511, %v1379, 0
        %v1516 = vsel %vm1511, %v1380, 0
        %v1519 = vsel %vm1511, %v1381, 0
        %v1522 = vsel %vm1511, %v1382, 0
        %v1525 = vsel %vm1511, %v1383, 0
        %v1528 = vsel %vm1511, %v1384, 0
        %v1531 = vsel %vm1511, %v1385, 0
        %v1534 = vsel %vm1511, %v1386, 0
        %v1537 = vsel %vm1511, %v1387, 0
        %v1540 = vsel %vm1511, %v1388, 0
        %v1543 = vsel %vm1511, %v1389, 0
        %v1546 = vsel %vm1511, %v1390, 0
        %v1549 = vsel %vm1511, %v1391, 0
        %v1552 = vsel %vm1511, %v1392, 0
        %v1555 = vsel %vm1511, %v1393, 0
        %v1558 = vsel %vm1511, %v1394, 0
        %v1561 = vsel %vm1511, %v1395, 0
        %v1564 = vsel %vm1511, %v1396, 0
        %v1567 = vsel %vm1511, %v1397, 0
        %v1570 = vsel %vm1511, %v1398, 0
        %v1573 = vsel %vm1511, %v1399, 0
        %v1576 = vsel %vm1511, %v1400, 0
        %v1579 = vsel %vm1511, %v1401, 0
        %v1582 = vsel %vm1511, %v1402, 0
        %v1585 = vsel %vm1511, %v1403, 0
        %v1588 = vsel %vm1511, %v1404, 0
        %v1591 = vsel %vm1511, %v1405, 0
        %v1594 = vsel %vm1511, %v1406, 0
        %v1597 = vsel %vm1511, %v1407, 0
        %v1600 = vsel %vm1511, %v1408, 0
        %v1603 = vsel %vm1511, %v1409, 0
        %v1606 = vsel %vm1511, %v1410, 0
        %v1609 = vsel %vm1511, %v1411, 0
        %v1612 = vsel %vm1511, %v1412, 0
        %v1615 = vsel %vm1511, %v1413, 0
        %v1618 = vsel %vm1511, %v1414, 0
        %v1621 = vsel %vm1511, %v1415, 0
        %v1624 = vsel %vm1511, %v1416, 0
        %v1627 = vsel %vm1511, %v1417, 0
        %v1630 = vsel %vm1511, %v1418, 0
        %v1633 = vsel %vm1511, %v1419, 0
        %v1636 = vsel %vm1511, %v1420, 0
        %v1639 = vsel %vm1511, %v1421, 0
        %v1642 = vsel %vm1511, %v1422, 0
        %v1645 = vsel %vm1511, %v1423, 0
        %v1648 = vsel %vm1511, %v1424, 0
        %v1651 = vsel %vm1511, %v1425, 0
        %v1654 = vsel %vm1511, %v1426, 0
        %v1657 = vsel %vm1511, %v1427, 0
        %v1660 = vsel %vm1511, %v1428, 0
        %v1663 = vsel %vm1511, %v1429, 0
        %v1666 = vsel %vm1511, %v1430, 0
        %v1669 = vsel %vm1511, %v1431, 0
        %v1672 = vsel %vm1511, %v1432, 0
        %v1675 = vsel %vm1511, %v1433, 0
        %v1678 = vsel %vm1511, %v1434, 0
        %v1681 = vsel %vm1511, %v1435, 0
        %v1684 = vsel %vm1511, %v1436, 0
        %v1687 = vsel %vm1511, %v1437, 0
        %v1690 = vsel %vm1511, %v1438, 0
        %v1693 = vsel %vm1511, %v1439, 0
        %v1696 = vsel %vm1511, %v1440, 0
        %v1699 = vsel %vm1511, %v1441, 0
        %v1702 = vsel %vm1511, %v1442, 0
        %v1705 = vsel %vm1511, %v1443, 0
        %v1708 = vsel %vm1511, %v1444, 0
        %v1711 = vsel %vm1511, %v1445, 0
        %v1714 = vsel %vm1511, %v1446, 0
        %v1717 = vsel %vm1511, %v1447, 0
        %v1720 = vsel %vm1511, %v1448, 0
        %v1723 = vsel %vm1511, %v1449, 0
        %v1726 = vsel %vm1511, %v1450, 0
        %v1729 = vsel %vm1511, %v1451, 0
        %v1732 = vsel %vm1511, %v1452, 0
        %v1735 = vsel %vm1511, %v1453, 0
        %v1738 = vsel %vm1511, %v1454, 0
        %v1741 = vsel %vm1511, %v1455, 0
        %v1744 = vsel %vm1511, %v1456, 0
        %v1747 = vsel %vm1511, %v1457, 0
        %v1750 = vsel %vm1511, %v1458, 0
        %v1753 = vsel %vm1511, %v1459, 0
        %v1756 = vsel %vm1511, %v1460, 0
        %v1759 = vsel %vm1511, %v1461, 0
        %v1762 = vsel %vm1511, %v1462, 0
        %v1765 = vsel %vm1511, %v1463, 0
        %v1768 = vsel %vm1511, %v1464, 0
        %v1771 = vsel %vm1511, %v1465, 0
        %v1774 = vsel %vm1511, %v1466, 0
        %v1777 = vsel %vm1511, %v1467, 0
        %v1780 = vsel %vm1511, %v1468, 0
        %v1783 = vsel %vm1511, %v1469, 0
        %v1786 = vsel %vm1511, %v1470, 0
        %v1789 = vsel %vm1511, %v1471, 0
        %v1792 = vsel %vm1511, %v1472, 0
        %v1795 = vsel %vm1511, %v1473, 0
        %v1798 = vsel %vm1511, %v1474, 0
        %v1801 = vsel %vm1511, %v1475, 0
        %v1804 = vsel %vm1511, %v1476, 0
        %v1807 = vsel %vm1511, %v1477, 0
        %v1810 = vsel %vm1511, %v1478, 0
        %v1813 = vsel %vm1511, %v1479, 0
        %v1816 = vsel %vm1511, %v1480, 0
        %v1819 = vsel %vm1511, %v1481, 0
        %v1822 = vsel %vm1511, %v1482, 0
        %v1825 = vsel %vm1511, %v1483, 0
        %v1828 = vsel %vm1511, %v1484, 0
        %v1831 = vsel %vm1511, %v1485, 0
        %v1834 = vsel %vm1511, %v1486, 0
        %v1837 = vsel %vm1511, %v1487, 0
        %v1840 = vsel %vm1511, %v1488, 0
        %v1843 = vsel %vm1511, %v1489, 0
        %v1846 = vsel %vm1511, %v1490, 0
        %v1849 = vsel %vm1511, %v1491, 0
        %v1852 = vsel %vm1511, %v1492, 0
        %v1855 = vsel %vm1511, %v1493, 0
        %v1858 = vsel %vm1511, %v1494, 0
        %v1861 = vsel %vm1511, %v1495, 0
        %v1864 = vsel %vm1511, %v1496, 0
        %v1867 = vsel %vm1511, %v1497, 0
        %v1870 = vsel %vm1511, %v1498, 0
        %v1873 = vsel %vm1511, %v1499, 0
        %v1876 = vsel %vm1511, %v1500, 0
        %v1879 = vsel %vm1511, %v1501, 0
        %v1882 = vsel %vm1511, %v1502, 0
        %v1885 = vsel %vm1511, %v1503, 0
        %v1888 = vsel %vm1511, %v1504, 0
        %v1891 = vsel %vm1511, %v1505, 0
        %v1894 = vsel %vm1511, %v1506, 0
        %vm1896 = vcmask 1046528
        %v1898 = vsel %vm1896, %v276, 0
        %1900 = vmatprep.subr.mxu0 0.0
        %1901 = vmatpush1.msra.mxu0 %v275
        %1902 = vmatprep.subr.mxu0 0.0
        %1903 = vmatpush1.msra.mxu0 %v1898
        %1904 = vmatprep.subr.mxu0 0.0
        %1905 = vmatpush1.msra.mxu0 0.0
        %1906 = vmatprep.subr.mxu0 0.0
        %1907 = vmatpush1.msra.mxu0 0.0
        %1908 = vmatprep.subr.mxu0 0.0
        %1909 = vmatpush1.msra.mxu0 0.0
        %1910 = vmatprep.subr.mxu0 0.0
        %1911 = vmatpush1.msra.mxu0 0.0
        %1912 = vmatprep.subr.mxu0 0.0
        %1913 = vmatpush1.msra.mxu0 0.0
        %1914 = vmatprep.subr.mxu0 0.0
        %1915 = vmatpush1.msra.mxu0 0.0
        %1916 = vmatprep.subr.mxu0 0.0
        %1917 = vmatpush1.msra.mxu0 0.0
        %1918 = vmatprep.subr.mxu0 0.0
        %1919 = vmatpush1.msra.mxu0 0.0
        %1920 = vmatprep.subr.mxu0 0.0
        %1921 = vmatpush1.msra.mxu0 0.0
        %1922 = vmatprep.subr.mxu0 0.0
        %1923 = vmatpush1.msra.mxu0 0.0
        %1924 = vmatprep.subr.mxu0 0.0
        %1925 = vmatpush1.msra.mxu0 0.0
        %1926 = vmatprep.subr.mxu0 0.0
        %1927 = vmatpush1.msra.mxu0 0.0
        %1928 = vmatprep.subr.mxu0 0.0
        %1929 = vmatpush1.msra.mxu0 0.0
        %1930 = vmatprep.subr.mxu0 0.0
        %1931 = vmatpush1.msra.mxu0 0.0
        %1932 = vmatprep.subr.mxu0 0.0
        %1933 = vmatpush1.msra.mxu0 0.0
        %1934 = vmatprep.subr.mxu0 0.0
        %1935 = vmatpush1.msra.mxu0 0.0
        %1936 = vmatprep.subr.mxu0 0.0
        %1937 = vmatpush1.msra.mxu0 0.0
        %1938 = vmatprep.subr.mxu0 0.0
        %1939 = vmatpush1.msra.mxu0 0.0
        %1940 = vmatprep.subr.mxu0 0.0
        %1941 = vmatpush1.msra.mxu0 0.0
        %1942 = vmatprep.subr.mxu0 0.0
        %1943 = vmatpush1.msra.mxu0 0.0
        %1944 = vmatprep.subr.mxu0 0.0
        %1945 = vmatpush1.msra.mxu0 0.0
        %1946 = vmatprep.subr.mxu0 0.0
        %1947 = vmatpush1.msra.mxu0 0.0
        %1948 = vmatprep.subr.mxu0 0.0
        %1949 = vmatpush1.msra.mxu0 0.0
        %1950 = vmatprep.subr.mxu0 0.0
        %1951 = vmatpush1.msra.mxu0 0.0
        %1952 = vmatprep.subr.mxu0 0.0
        %1953 = vmatpush1.msra.mxu0 0.0
        %1954 = vmatprep.subr.mxu0 0.0
        %1955 = vmatpush1.msra.mxu0 0.0
        %1956 = vmatprep.subr.mxu0 0.0
        %1957 = vmatpush1.msra.mxu0 0.0
        %1958 = vmatprep.subr.mxu0 0.0
        %1959 = vmatpush1.msra.mxu0 0.0
        %1960 = vmatprep.subr.mxu0 0.0
        %1961 = vmatpush1.msra.mxu0 0.0
        %1962 = vmatprep.subr.mxu0 0.0
        %1963 = vmatpush1.msra.mxu0 0.0
        %1964 = vmatprep.mubr.f32.mxu0 0.0
        %1965 = vmatmul.mubr.f32.gmra.mrb[0].mxu0 %v1513
        %v1966 = vpop.f32.mrb[0].mxu0
        %v1967 = vadd.f32 %v1510, %v1966
        %v1968 = vpop.f32.mrb[0].mxu0
        %1969 = vmatprep.mubr.f32.mxu0 0.0
        %1970 = vmatmul.mubr.f32.gmra.mrb[0].mxu0 %v1516
        %v1971 = vpop.f32.mrb[0].mxu0
        %v1972 = vadd.f32 %v1510, %v1971
        %v1973 = vpop.f32.mrb[0].mxu0
        %1974 = vmatprep.mubr.f32.mxu0 0.0
        %1975 = vmatmul.mubr.f32.gmra.mrb[0].mxu0 %v1519
        %v1976 = vpop.f32.mrb[0].mxu0
        %v1977 = vadd.f32 %v1510, %v1976
        %v1978 = vpop.f32.mrb[0].mxu0
        %1979 = vmatprep.mubr.f32.mxu0 0.0
        %1980 = vmatmul.mubr.f32.gmra.mrb[0].mxu0 %v1522
        %v1981 = vpop.f32.mrb[0].mxu0
        %v1982 = vadd.f32 %v1510, %v1981
        %v1983 = vpop.f32.mrb[0].mxu0
        %1984 = vmatprep.mubr.f32.mxu0 0.0
        %1985 = vmatmul.mubr.f32.gmra.mrb[0].mxu0 %v1525
        %v1986 = vpop.f32.mrb[0].mxu0
        %v1987 = vadd.f32 %v1510, %v1986
        %v1988 = vpop.f32.mrb[0].mxu0
        %1989 = vmatprep.mubr.f32.mxu0 0.0
        %1990 = vmatmul.mubr.f32.gmra.mrb[0].mxu0 %v1528
        %v1991 = vpop.f32.mrb[0].mxu0
        %v1992 = vadd.f32 %v1510, %v1991
        %v1993 = vpop.f32.mrb[0].mxu0
        %1994 = vmatprep.mubr.f32.mxu0 0.0
        %1995 = vmatmul.mubr.f32.gmra.mrb[0].mxu0 %v1531
        %v1996 = vpop.f32.mrb[0].mxu0
        %v1997 = vadd.f32 %v1510, %v1996
        %v1998 = vpop.f32.mrb[0].mxu0
        %1999 = vmatprep.mubr.f32.mxu0 0.0
        %2000 = vmatmul.mubr.f32.gmra.mrb[0].mxu0 %v1534
        %v2001 = vpop.f32.mrb[0].mxu0
        %v2002 = vadd.f32 %v1510, %v2001
        %v2003 = vpop.f32.mrb[0].mxu0
        %2004 = vmatprep.mubr.f32.mxu0 0.0
        %2005 = vmatmul.mubr.f32.gmra.mrb[0].mxu0 %v1537
        %v2006 = vpop.f32.mrb[0].mxu0
        %v2007 = vadd.f32 %v1510, %v2006
        %v2008 = vpop.f32.mrb[0].mxu0
        %2009 = vmatprep.mubr.f32.mxu0 0.0
        %2010 = vmatmul.mubr.f32.gmra.mrb[0].mxu0 %v1540
        %v2011 = vpop.f32.mrb[0].mxu0
        %v2012 = vadd.f32 %v1510, %v2011
        %v2013 = vpop.f32.mrb[0].mxu0
        %2014 = vmatprep.mubr.f32.mxu0 0.0
        %2015 = vmatmul.mubr.f32.gmra.mrb[0].mxu0 %v1543
        %v2016 = vpop.f32.mrb[0].mxu0
        %v2017 = vadd.f32 %v1510, %v2016
        %v2018 = vpop.f32.mrb[0].mxu0
        %2019 = vmatprep.mubr.f32.mxu0 0.0
        %2020 = vmatmul.mubr.f32.gmra.mrb[0].mxu0 %v1546
        %v2021 = vpop.f32.mrb[0].mxu0
        %v2022 = vadd.f32 %v1510, %v2021
        %v2023 = vpop.f32.mrb[0].mxu0
        %2024 = vmatprep.mubr.f32.mxu0 0.0
        %2025 = vmatmul.mubr.f32.gmra.mrb[0].mxu0 %v1549
        %v2026 = vpop.f32.mrb[0].mxu0
        %v2027 = vadd.f32 %v1510, %v2026
        %v2028 = vpop.f32.mrb[0].mxu0
        %2029 = vmatprep.mubr.f32.mxu0 0.0
        %2030 = vmatmul.mubr.f32.gmra.mrb[0].mxu0 %v1552
        %v2031 = vpop.f32.mrb[0].mxu0
        %v2032 = vadd.f32 %v1510, %v2031
        %v2033 = vpop.f32.mrb[0].mxu0
        %2034 = vmatprep.mubr.f32.mxu0 0.0
        %2035 = vmatmul.mubr.f32.gmra.mrb[0].mxu0 %v1555
        %v2036 = vpop.f32.mrb[0].mxu0
        %v2037 = vadd.f32 %v1510, %v2036
        %v2038 = vpop.f32.mrb[0].mxu0
        %2039 = vmatprep.mubr.f32.mxu0 0.0
        %2040 = vmatmul.mubr.f32.gmra.mrb[0].mxu0 %v1558
        %v2041 = vpop.f32.mrb[0].mxu0
        %v2042 = vadd.f32 %v1510, %v2041
        %v2043 = vpop.f32.mrb[0].mxu0
        %2044 = vmatprep.mubr.f32.mxu0 0.0
        %2045 = vmatmul.mubr.f32.gmra.mrb[0].mxu0 %v1561
        %v2046 = vpop.f32.mrb[0].mxu0
        %v2047 = vadd.f32 %v1510, %v2046
        %v2048 = vpop.f32.mrb[0].mxu0
        %2049 = vmatprep.mubr.f32.mxu0 0.0
        %2050 = vmatmul.mubr.f32.gmra.mrb[0].mxu0 %v1564
        %v2051 = vpop.f32.mrb[0].mxu0
        %v2052 = vadd.f32 %v1510, %v2051
        %v2053 = vpop.f32.mrb[0].mxu0
        %2054 = vmatprep.mubr.f32.mxu0 0.0
        %2055 = vmatmul.mubr.f32.gmra.mrb[0].mxu0 %v1567
        %v2056 = vpop.f32.mrb[0].mxu0
        %v2057 = vadd.f32 %v1510, %v2056
        %v2058 = vpop.f32.mrb[0].mxu0
        %2059 = vmatprep.mubr.f32.mxu0 0.0
        %2060 = vmatmul.mubr.f32.gmra.mrb[0].mxu0 %v1570
        %v2061 = vpop.f32.mrb[0].mxu0
        %v2062 = vadd.f32 %v1510, %v2061
        %v2063 = vpop.f32.mrb[0].mxu0
        %2064 = vmatprep.mubr.f32.mxu0 0.0
        %2065 = vmatmul.mubr.f32.gmra.mrb[0].mxu0 %v1573
        %v2066 = vpop.f32.mrb[0].mxu0
        %v2067 = vadd.f32 %v1510, %v2066
        %v2068 = vpop.f32.mrb[0].mxu0
        %2069 = vmatprep.mubr.f32.mxu0 0.0
        %2070 = vmatmul.mubr.f32.gmra.mrb[0].mxu0 %v1576
        %v2071 = vpop.f32.mrb[0].mxu0
        %v2072 = vadd.f32 %v1510, %v2071
        %v2073 = vpop.f32.mrb[0].mxu0
        %2074 = vmatprep.mubr.f32.mxu0 0.0
        %2075 = vmatmul.mubr.f32.gmra.mrb[0].mxu0 %v1579
        %v2076 = vpop.f32.mrb[0].mxu0
        %v2077 = vadd.f32 %v1510, %v2076
        %v2078 = vpop.f32.mrb[0].mxu0
        %2079 = vmatprep.mubr.f32.mxu0 0.0
        %2080 = vmatmul.mubr.f32.gmra.mrb[0].mxu0 %v1582
        %v2081 = vpop.f32.mrb[0].mxu0
        %v2082 = vadd.f32 %v1510, %v2081
        %v2083 = vpop.f32.mrb[0].mxu0
        %2084 = vmatprep.mubr.f32.mxu0 0.0
        %2085 = vmatmul.mubr.f32.gmra.mrb[0].mxu0 %v1585
        %v2086 = vpop.f32.mrb[0].mxu0
        %v2087 = vadd.f32 %v1510, %v2086
        %v2088 = vpop.f32.mrb[0].mxu0
        %2089 = vmatprep.mubr.f32.mxu0 0.0
        %2090 = vmatmul.mubr.f32.gmra.mrb[0].mxu0 %v1588
        %v2091 = vpop.f32.mrb[0].mxu0
        %v2092 = vadd.f32 %v1510, %v2091
        %v2093 = vpop.f32.mrb[0].mxu0
        %2094 = vmatprep.mubr.f32.mxu0 0.0
        %2095 = vmatmul.mubr.f32.gmra.mrb[0].mxu0 %v1591
        %v2096 = vpop.f32.mrb[0].mxu0
        %v2097 = vadd.f32 %v1510, %v2096
        %v2098 = vpop.f32.mrb[0].mxu0
        %2099 = vmatprep.mubr.f32.mxu0 0.0
        %2100 = vmatmul.mubr.f32.gmra.mrb[0].mxu0 %v1594
        %v2101 = vpop.f32.mrb[0].mxu0
        %v2102 = vadd.f32 %v1510, %v2101
        %v2103 = vpop.f32.mrb[0].mxu0
        %2104 = vmatprep.mubr.f32.mxu0 0.0
        %2105 = vmatmul.mubr.f32.gmra.mrb[0].mxu0 %v1597
        %v2106 = vpop.f32.mrb[0].mxu0
        %v2107 = vadd.f32 %v1510, %v2106
        %v2108 = vpop.f32.mrb[0].mxu0
        %2109 = vmatprep.mubr.f32.mxu0 0.0
        %2110 = vmatmul.mubr.f32.gmra.mrb[0].mxu0 %v1600
        %v2111 = vpop.f32.mrb[0].mxu0
        %v2112 = vadd.f32 %v1510, %v2111
        %v2113 = vpop.f32.mrb[0].mxu0
        %2114 = vmatprep.mubr.f32.mxu0 0.0
        %2115 = vmatmul.mubr.f32.gmra.mrb[0].mxu0 %v1603
        %v2116 = vpop.f32.mrb[0].mxu0
        %v2117 = vadd.f32 %v1510, %v2116
        %v2118 = vpop.f32.mrb[0].mxu0
        %2119 = vmatprep.mubr.f32.mxu0 0.0
        %2120 = vmatmul.mubr.f32.gmra.mrb[0].mxu0 %v1606
        %v2121 = vpop.f32.mrb[0].mxu0
        %v2122 = vadd.f32 %v1510, %v2121
        %v2123 = vpop.f32.mrb[0].mxu0
        %2124 = vmatprep.mubr.f32.mxu0 0.0
        %2125 = vmatmul.mubr.f32.gmra.mrb[0].mxu0 %v1609
        %v2126 = vpop.f32.mrb[0].mxu0
        %v2127 = vadd.f32 %v1510, %v2126
        %v2128 = vpop.f32.mrb[0].mxu0
        %2129 = vmatprep.mubr.f32.mxu0 0.0
        %2130 = vmatmul.mubr.f32.gmra.mrb[0].mxu0 %v1612
        %v2131 = vpop.f32.mrb[0].mxu0
        %v2132 = vadd.f32 %v1510, %v2131
        %v2133 = vpop.f32.mrb[0].mxu0
        %2134 = vmatprep.mubr.f32.mxu0 0.0
        %2135 = vmatmul.mubr.f32.gmra.mrb[0].mxu0 %v1615
        %v2136 = vpop.f32.mrb[0].mxu0
        %v2137 = vadd.f32 %v1510, %v2136
        %v2138 = vpop.f32.mrb[0].mxu0
        %2139 = vmatprep.mubr.f32.mxu0 0.0
        %2140 = vmatmul.mubr.f32.gmra.mrb[0].mxu0 %v1618
        %v2141 = vpop.f32.mrb[0].mxu0
        %v2142 = vadd.f32 %v1510, %v2141
        %v2143 = vpop.f32.mrb[0].mxu0
        %2144 = vmatprep.mubr.f32.mxu0 0.0
        %2145 = vmatmul.mubr.f32.gmra.mrb[0].mxu0 %v1621
        %v2146 = vpop.f32.mrb[0].mxu0
        %v2147 = vadd.f32 %v1510, %v2146
        %v2148 = vpop.f32.mrb[0].mxu0
        %2149 = vmatprep.mubr.f32.mxu0 0.0
        %2150 = vmatmul.mubr.f32.gmra.mrb[0].mxu0 %v1624
        %v2151 = vpop.f32.mrb[0].mxu0
        %v2152 = vadd.f32 %v1510, %v2151
        %v2153 = vpop.f32.mrb[0].mxu0
        %2154 = vmatprep.mubr.f32.mxu0 0.0
        %2155 = vmatmul.mubr.f32.gmra.mrb[0].mxu0 %v1627
        %v2156 = vpop.f32.mrb[0].mxu0
        %v2157 = vadd.f32 %v1510, %v2156
        %v2158 = vpop.f32.mrb[0].mxu0
        %2159 = vmatprep.mubr.f32.mxu0 0.0
        %2160 = vmatmul.mubr.f32.gmra.mrb[0].mxu0 %v1630
        %v2161 = vpop.f32.mrb[0].mxu0
        %v2162 = vadd.f32 %v1510, %v2161
        %v2163 = vpop.f32.mrb[0].mxu0
        %2164 = vmatprep.mubr.f32.mxu0 0.0
        %2165 = vmatmul.mubr.f32.gmra.mrb[0].mxu0 %v1633
        %v2166 = vpop.f32.mrb[0].mxu0
        %v2167 = vadd.f32 %v1510, %v2166
        %v2168 = vpop.f32.mrb[0].mxu0
        %2169 = vmatprep.mubr.f32.mxu0 0.0
        %2170 = vmatmul.mubr.f32.gmra.mrb[0].mxu0 %v1636
        %v2171 = vpop.f32.mrb[0].mxu0
        %v2172 = vadd.f32 %v1510, %v2171
        %v2173 = vpop.f32.mrb[0].mxu0
        %2174 = vmatprep.mubr.f32.mxu0 0.0
        %2175 = vmatmul.mubr.f32.gmra.mrb[0].mxu0 %v1639
        %v2176 = vpop.f32.mrb[0].mxu0
        %v2177 = vadd.f32 %v1510, %v2176
        %v2178 = vpop.f32.mrb[0].mxu0
        %2179 = vmatprep.mubr.f32.mxu0 0.0
        %2180 = vmatmul.mubr.f32.gmra.mrb[0].mxu0 %v1642
        %v2181 = vpop.f32.mrb[0].mxu0
        %v2182 = vadd.f32 %v1510, %v2181
        %v2183 = vpop.f32.mrb[0].mxu0
        %2184 = vmatprep.mubr.f32.mxu0 0.0
        %2185 = vmatmul.mubr.f32.gmra.mrb[0].mxu0 %v1645
        %v2186 = vpop.f32.mrb[0].mxu0
        %v2187 = vadd.f32 %v1510, %v2186
        %v2188 = vpop.f32.mrb[0].mxu0
        %2189 = vmatprep.mubr.f32.mxu0 0.0
        %2190 = vmatmul.mubr.f32.gmra.mrb[0].mxu0 %v1648
        %v2191 = vpop.f32.mrb[0].mxu0
        %v2192 = vadd.f32 %v1510, %v2191
        %v2193 = vpop.f32.mrb[0].mxu0
        %2194 = vmatprep.mubr.f32.mxu0 0.0
        %2195 = vmatmul.mubr.f32.gmra.mrb[0].mxu0 %v1651
        %v2196 = vpop.f32.mrb[0].mxu0
        %v2197 = vadd.f32 %v1510, %v2196
        %v2198 = vpop.f32.mrb[0].mxu0
        %2199 = vmatprep.mubr.f32.mxu0 0.0
        %2200 = vmatmul.mubr.f32.gmra.mrb[0].mxu0 %v1654
        %v2201 = vpop.f32.mrb[0].mxu0
        %v2202 = vadd.f32 %v1510, %v2201
        %v2203 = vpop.f32.mrb[0].mxu0
        %2204 = vmatprep.mubr.f32.mxu0 0.0
        %2205 = vmatmul.mubr.f32.gmra.mrb[0].mxu0 %v1657
        %v2206 = vpop.f32.mrb[0].mxu0
        %v2207 = vadd.f32 %v1510, %v2206
        %v2208 = vpop.f32.mrb[0].mxu0
        %2209 = vmatprep.mubr.f32.mxu0 0.0
        %2210 = vmatmul.mubr.f32.gmra.mrb[0].mxu0 %v1660
        %v2211 = vpop.f32.mrb[0].mxu0
        %v2212 = vadd.f32 %v1510, %v2211
        %v2213 = vpop.f32.mrb[0].mxu0
        %2214 = vmatprep.mubr.f32.mxu0 0.0
        %2215 = vmatmul.mubr.f32.gmra.mrb[0].mxu0 %v1663
        %v2216 = vpop.f32.mrb[0].mxu0
        %v2217 = vadd.f32 %v1510, %v2216
        %v2218 = vpop.f32.mrb[0].mxu0
        %2219 = vmatprep.mubr.f32.mxu0 0.0
        %2220 = vmatmul.mubr.f32.gmra.mrb[0].mxu0 %v1666
        %v2221 = vpop.f32.mrb[0].mxu0
        %v2222 = vadd.f32 %v1510, %v2221
        %v2223 = vpop.f32.mrb[0].mxu0
        %2224 = vmatprep.mubr.f32.mxu0 0.0
        %2225 = vmatmul.mubr.f32.gmra.mrb[0].mxu0 %v1669
        %v2226 = vpop.f32.mrb[0].mxu0
        %v2227 = vadd.f32 %v1510, %v2226
        %v2228 = vpop.f32.mrb[0].mxu0
        %2229 = vmatprep.mubr.f32.mxu0 0.0
        %2230 = vmatmul.mubr.f32.gmra.mrb[0].mxu0 %v1672
        %v2231 = vpop.f32.mrb[0].mxu0
        %v2232 = vadd.f32 %v1510, %v2231
        %v2233 = vpop.f32.mrb[0].mxu0
        %2234 = vmatprep.mubr.f32.mxu0 0.0
        %2235 = vmatmul.mubr.f32.gmra.mrb[0].mxu0 %v1675
        %v2236 = vpop.f32.mrb[0].mxu0
        %v2237 = vadd.f32 %v1510, %v2236
        %v2238 = vpop.f32.mrb[0].mxu0
        %2239 = vmatprep.mubr.f32.mxu0 0.0
        %2240 = vmatmul.mubr.f32.gmra.mrb[0].mxu0 %v1678
        %v2241 = vpop.f32.mrb[0].mxu0
        %v2242 = vadd.f32 %v1510, %v2241
        %v2243 = vpop.f32.mrb[0].mxu0
        %2244 = vmatprep.mubr.f32.mxu0 0.0
        %2245 = vmatmul.mubr.f32.gmra.mrb[0].mxu0 %v1681
        %v2246 = vpop.f32.mrb[0].mxu0
        %v2247 = vadd.f32 %v1510, %v2246
        %v2248 = vpop.f32.mrb[0].mxu0
        %2249 = vmatprep.mubr.f32.mxu0 0.0
        %2250 = vmatmul.mubr.f32.gmra.mrb[0].mxu0 %v1684
        %v2251 = vpop.f32.mrb[0].mxu0
        %v2252 = vadd.f32 %v1510, %v2251
        %v2253 = vpop.f32.mrb[0].mxu0
        %2254 = vmatprep.mubr.f32.mxu0 0.0
        %2255 = vmatmul.mubr.f32.gmra.mrb[0].mxu0 %v1687
        %v2256 = vpop.f32.mrb[0].mxu0
        %v2257 = vadd.f32 %v1510, %v2256
        %v2258 = vpop.f32.mrb[0].mxu0
        %2259 = vmatprep.mubr.f32.mxu0 0.0
        %2260 = vmatmul.mubr.f32.gmra.mrb[0].mxu0 %v1690
        %v2261 = vpop.f32.mrb[0].mxu0
        %v2262 = vadd.f32 %v1510, %v2261
        %v2263 = vpop.f32.mrb[0].mxu0
        %2264 = vmatprep.mubr.f32.mxu0 0.0
        %2265 = vmatmul.mubr.f32.gmra.mrb[0].mxu0 %v1693
        %v2266 = vpop.f32.mrb[0].mxu0
        %v2267 = vadd.f32 %v1510, %v2266
        %v2268 = vpop.f32.mrb[0].mxu0
        %2269 = vmatprep.mubr.f32.mxu0 0.0
        %2270 = vmatmul.mubr.f32.gmra.mrb[0].mxu0 %v1696
        %v2271 = vpop.f32.mrb[0].mxu0
        %v2272 = vadd.f32 %v1510, %v2271
        %v2273 = vpop.f32.mrb[0].mxu0
        %2274 = vmatprep.mubr.f32.mxu0 0.0
        %2275 = vmatmul.mubr.f32.gmra.mrb[0].mxu0 %v1699
        %v2276 = vpop.f32.mrb[0].mxu0
        %v2277 = vadd.f32 %v1510, %v2276
        %v2278 = vpop.f32.mrb[0].mxu0
        %2279 = vmatprep.mubr.f32.mxu0 0.0
        %2280 = vmatmul.mubr.f32.gmra.mrb[0].mxu0 %v1702
        %v2281 = vpop.f32.mrb[0].mxu0
        %v2282 = vadd.f32 %v1510, %v2281
        %v2283 = vpop.f32.mrb[0].mxu0
        %2284 = vmatprep.mubr.f32.mxu0 0.0
        %2285 = vmatmul.mubr.f32.gmra.mrb[0].mxu0 %v1705
        %v2286 = vpop.f32.mrb[0].mxu0
        %v2287 = vadd.f32 %v1510, %v2286
        %v2288 = vpop.f32.mrb[0].mxu0
        %2289 = vmatprep.mubr.f32.mxu0 0.0
        %2290 = vmatmul.mubr.f32.gmra.mrb[0].mxu0 %v1708
        %v2291 = vpop.f32.mrb[0].mxu0
        %v2292 = vadd.f32 %v1510, %v2291
        %v2293 = vpop.f32.mrb[0].mxu0
        %2294 = vmatprep.mubr.f32.mxu0 0.0
        %2295 = vmatmul.mubr.f32.gmra.mrb[0].mxu0 %v1711
        %v2296 = vpop.f32.mrb[0].mxu0
        %v2297 = vadd.f32 %v1510, %v2296
        %v2298 = vpop.f32.mrb[0].mxu0
        %2299 = vmatprep.mubr.f32.mxu0 0.0
        %2300 = vmatmul.mubr.f32.gmra.mrb[0].mxu0 %v1714
        %v2301 = vpop.f32.mrb[0].mxu0
        %v2302 = vadd.f32 %v1510, %v2301
        %v2303 = vpop.f32.mrb[0].mxu0
        %2304 = vmatprep.mubr.f32.mxu0 0.0
        %2305 = vmatmul.mubr.f32.gmra.mrb[0].mxu0 %v1717
        %v2306 = vpop.f32.mrb[0].mxu0
        %v2307 = vadd.f32 %v1510, %v2306
        %v2308 = vpop.f32.mrb[0].mxu0
        %2309 = vmatprep.mubr.f32.mxu0 0.0
        %2310 = vmatmul.mubr.f32.gmra.mrb[0].mxu0 %v1720
        %v2311 = vpop.f32.mrb[0].mxu0
        %v2312 = vadd.f32 %v1510, %v2311
        %v2313 = vpop.f32.mrb[0].mxu0
        %2314 = vmatprep.mubr.f32.mxu0 0.0
        %2315 = vmatmul.mubr.f32.gmra.mrb[0].mxu0 %v1723
        %v2316 = vpop.f32.mrb[0].mxu0
        %v2317 = vadd.f32 %v1510, %v2316
        %v2318 = vpop.f32.mrb[0].mxu0
        %2319 = vmatprep.mubr.f32.mxu0 0.0
        %2320 = vmatmul.mubr.f32.gmra.mrb[0].mxu0 %v1726
        %v2321 = vpop.f32.mrb[0].mxu0
        %v2322 = vadd.f32 %v1510, %v2321
        %v2323 = vpop.f32.mrb[0].mxu0
        %2324 = vmatprep.mubr.f32.mxu0 0.0
        %2325 = vmatmul.mubr.f32.gmra.mrb[0].mxu0 %v1729
        %v2326 = vpop.f32.mrb[0].mxu0
        %v2327 = vadd.f32 %v1510, %v2326
        %v2328 = vpop.f32.mrb[0].mxu0
        %2329 = vmatprep.mubr.f32.mxu0 0.0
        %2330 = vmatmul.mubr.f32.gmra.mrb[0].mxu0 %v1732
        %v2331 = vpop.f32.mrb[0].mxu0
        %v2332 = vadd.f32 %v1510, %v2331
        %v2333 = vpop.f32.mrb[0].mxu0
        %2334 = vmatprep.mubr.f32.mxu0 0.0
        %2335 = vmatmul.mubr.f32.gmra.mrb[0].mxu0 %v1735
        %v2336 = vpop.f32.mrb[0].mxu0
        %v2337 = vadd.f32 %v1510, %v2336
        %v2338 = vpop.f32.mrb[0].mxu0
        %2339 = vmatprep.mubr.f32.mxu0 0.0
        %2340 = vmatmul.mubr.f32.gmra.mrb[0].mxu0 %v1738
        %v2341 = vpop.f32.mrb[0].mxu0
        %v2342 = vadd.f32 %v1510, %v2341
        %v2343 = vpop.f32.mrb[0].mxu0
        %2344 = vmatprep.mubr.f32.mxu0 0.0
        %2345 = vmatmul.mubr.f32.gmra.mrb[0].mxu0 %v1741
        %v2346 = vpop.f32.mrb[0].mxu0
        %v2347 = vadd.f32 %v1510, %v2346
        %v2348 = vpop.f32.mrb[0].mxu0
        %2349 = vmatprep.mubr.f32.mxu0 0.0
        %2350 = vmatmul.mubr.f32.gmra.mrb[0].mxu0 %v1744
        %v2351 = vpop.f32.mrb[0].mxu0
        %v2352 = vadd.f32 %v1510, %v2351
        %v2353 = vpop.f32.mrb[0].mxu0
        %2354 = vmatprep.mubr.f32.mxu0 0.0
        %2355 = vmatmul.mubr.f32.gmra.mrb[0].mxu0 %v1747
        %v2356 = vpop.f32.mrb[0].mxu0
        %v2357 = vadd.f32 %v1510, %v2356
        %v2358 = vpop.f32.mrb[0].mxu0
        %2359 = vmatprep.mubr.f32.mxu0 0.0
        %2360 = vmatmul.mubr.f32.gmra.mrb[0].mxu0 %v1750
        %v2361 = vpop.f32.mrb[0].mxu0
        %v2362 = vadd.f32 %v1510, %v2361
        %v2363 = vpop.f32.mrb[0].mxu0
        %2364 = vmatprep.mubr.f32.mxu0 0.0
        %2365 = vmatmul.mubr.f32.gmra.mrb[0].mxu0 %v1753
        %v2366 = vpop.f32.mrb[0].mxu0
        %v2367 = vadd.f32 %v1510, %v2366
        %v2368 = vpop.f32.mrb[0].mxu0
        %2369 = vmatprep.mubr.f32.mxu0 0.0
        %2370 = vmatmul.mubr.f32.gmra.mrb[0].mxu0 %v1756
        %v2371 = vpop.f32.mrb[0].mxu0
        %v2372 = vadd.f32 %v1510, %v2371
        %v2373 = vpop.f32.mrb[0].mxu0
        %2374 = vmatprep.mubr.f32.mxu0 0.0
        %2375 = vmatmul.mubr.f32.gmra.mrb[0].mxu0 %v1759
        %v2376 = vpop.f32.mrb[0].mxu0
        %v2377 = vadd.f32 %v1510, %v2376
        %v2378 = vpop.f32.mrb[0].mxu0
        %2379 = vmatprep.mubr.f32.mxu0 0.0
        %2380 = vmatmul.mubr.f32.gmra.mrb[0].mxu0 %v1762
        %v2381 = vpop.f32.mrb[0].mxu0
        %v2382 = vadd.f32 %v1510, %v2381
        %v2383 = vpop.f32.mrb[0].mxu0
        %2384 = vmatprep.mubr.f32.mxu0 0.0
        %2385 = vmatmul.mubr.f32.gmra.mrb[0].mxu0 %v1765
        %v2386 = vpop.f32.mrb[0].mxu0
        %v2387 = vadd.f32 %v1510, %v2386
        %v2388 = vpop.f32.mrb[0].mxu0
        %2389 = vmatprep.mubr.f32.mxu0 0.0
        %2390 = vmatmul.mubr.f32.gmra.mrb[0].mxu0 %v1768
        %v2391 = vpop.f32.mrb[0].mxu0
        %v2392 = vadd.f32 %v1510, %v2391
        %v2393 = vpop.f32.mrb[0].mxu0
        %2394 = vmatprep.mubr.f32.mxu0 0.0
        %2395 = vmatmul.mubr.f32.gmra.mrb[0].mxu0 %v1771
        %v2396 = vpop.f32.mrb[0].mxu0
        %v2397 = vadd.f32 %v1510, %v2396
        %v2398 = vpop.f32.mrb[0].mxu0
        %2399 = vmatprep.mubr.f32.mxu0 0.0
        %2400 = vmatmul.mubr.f32.gmra.mrb[0].mxu0 %v1774
        %v2401 = vpop.f32.mrb[0].mxu0
        %v2402 = vadd.f32 %v1510, %v2401
        %v2403 = vpop.f32.mrb[0].mxu0
        %2404 = vmatprep.mubr.f32.mxu0 0.0
        %2405 = vmatmul.mubr.f32.gmra.mrb[0].mxu0 %v1777
        %v2406 = vpop.f32.mrb[0].mxu0
        %v2407 = vadd.f32 %v1510, %v2406
        %v2408 = vpop.f32.mrb[0].mxu0
        %2409 = vmatprep.mubr.f32.mxu0 0.0
        %2410 = vmatmul.mubr.f32.gmra.mrb[0].mxu0 %v1780
        %v2411 = vpop.f32.mrb[0].mxu0
        %v2412 = vadd.f32 %v1510, %v2411
        %v2413 = vpop.f32.mrb[0].mxu0
        %2414 = vmatprep.mubr.f32.mxu0 0.0
        %2415 = vmatmul.mubr.f32.gmra.mrb[0].mxu0 %v1783
        %v2416 = vpop.f32.mrb[0].mxu0
        %v2417 = vadd.f32 %v1510, %v2416
        %v2418 = vpop.f32.mrb[0].mxu0
        %2419 = vmatprep.mubr.f32.mxu0 0.0
        %2420 = vmatmul.mubr.f32.gmra.mrb[0].mxu0 %v1786
        %v2421 = vpop.f32.mrb[0].mxu0
        %v2422 = vadd.f32 %v1510, %v2421
        %v2423 = vpop.f32.mrb[0].mxu0
        %2424 = vmatprep.mubr.f32.mxu0 0.0
        %2425 = vmatmul.mubr.f32.gmra.mrb[0].mxu0 %v1789
        %v2426 = vpop.f32.mrb[0].mxu0
        %v2427 = vadd.f32 %v1510, %v2426
        %v2428 = vpop.f32.mrb[0].mxu0
        %2429 = vmatprep.mubr.f32.mxu0 0.0
        %2430 = vmatmul.mubr.f32.gmra.mrb[0].mxu0 %v1792
        %v2431 = vpop.f32.mrb[0].mxu0
        %v2432 = vadd.f32 %v1510, %v2431
        %v2433 = vpop.f32.mrb[0].mxu0
        %2434 = vmatprep.mubr.f32.mxu0 0.0
        %2435 = vmatmul.mubr.f32.gmra.mrb[0].mxu0 %v1795
        %v2436 = vpop.f32.mrb[0].mxu0
        %v2437 = vadd.f32 %v1510, %v2436
        %v2438 = vpop.f32.mrb[0].mxu0
        %2439 = vmatprep.mubr.f32.mxu0 0.0
        %2440 = vmatmul.mubr.f32.gmra.mrb[0].mxu0 %v1798
        %v2441 = vpop.f32.mrb[0].mxu0
        %v2442 = vadd.f32 %v1510, %v2441
        %v2443 = vpop.f32.mrb[0].mxu0
        %2444 = vmatprep.mubr.f32.mxu0 0.0
        %2445 = vmatmul.mubr.f32.gmra.mrb[0].mxu0 %v1801
        %v2446 = vpop.f32.mrb[0].mxu0
        %v2447 = vadd.f32 %v1510, %v2446
        %v2448 = vpop.f32.mrb[0].mxu0
        %2449 = vmatprep.mubr.f32.mxu0 0.0
        %2450 = vmatmul.mubr.f32.gmra.mrb[0].mxu0 %v1804
        %v2451 = vpop.f32.mrb[0].mxu0
        %v2452 = vadd.f32 %v1510, %v2451
        %v2453 = vpop.f32.mrb[0].mxu0
        %2454 = vmatprep.mubr.f32.mxu0 0.0
        %2455 = vmatmul.mubr.f32.gmra.mrb[0].mxu0 %v1807
        %v2456 = vpop.f32.mrb[0].mxu0
        %v2457 = vadd.f32 %v1510, %v2456
        %v2458 = vpop.f32.mrb[0].mxu0
        %2459 = vmatprep.mubr.f32.mxu0 0.0
        %2460 = vmatmul.mubr.f32.gmra.mrb[0].mxu0 %v1810
        %v2461 = vpop.f32.mrb[0].mxu0
        %v2462 = vadd.f32 %v1510, %v2461
        %v2463 = vpop.f32.mrb[0].mxu0
        %2464 = vmatprep.mubr.f32.mxu0 0.0
        %2465 = vmatmul.mubr.f32.gmra.mrb[0].mxu0 %v1813
        %v2466 = vpop.f32.mrb[0].mxu0
        %v2467 = vadd.f32 %v1510, %v2466
        %v2468 = vpop.f32.mrb[0].mxu0
        %2469 = vmatprep.mubr.f32.mxu0 0.0
        %2470 = vmatmul.mubr.f32.gmra.mrb[0].mxu0 %v1816
        %v2471 = vpop.f32.mrb[0].mxu0
        %v2472 = vadd.f32 %v1510, %v2471
        %v2473 = vpop.f32.mrb[0].mxu0
        %2474 = vmatprep.mubr.f32.mxu0 0.0
        %2475 = vmatmul.mubr.f32.gmra.mrb[0].mxu0 %v1819
        %v2476 = vpop.f32.mrb[0].mxu0
        %v2477 = vadd.f32 %v1510, %v2476
        %v2478 = vpop.f32.mrb[0].mxu0
        %2479 = vmatprep.mubr.f32.mxu0 0.0
        %2480 = vmatmul.mubr.f32.gmra.mrb[0].mxu0 %v1822
        %v2481 = vpop.f32.mrb[0].mxu0
        %v2482 = vadd.f32 %v1510, %v2481
        %v2483 = vpop.f32.mrb[0].mxu0
        %2484 = vmatprep.mubr.f32.mxu0 0.0
        %2485 = vmatmul.mubr.f32.gmra.mrb[0].mxu0 %v1825
        %v2486 = vpop.f32.mrb[0].mxu0
        %v2487 = vadd.f32 %v1510, %v2486
        %v2488 = vpop.f32.mrb[0].mxu0
        %2489 = vmatprep.mubr.f32.mxu0 0.0
        %2490 = vmatmul.mubr.f32.gmra.mrb[0].mxu0 %v1828
        %v2491 = vpop.f32.mrb[0].mxu0
        %v2492 = vadd.f32 %v1510, %v2491
        %v2493 = vpop.f32.mrb[0].mxu0
        %2494 = vmatprep.mubr.f32.mxu0 0.0
        %2495 = vmatmul.mubr.f32.gmra.mrb[0].mxu0 %v1831
        %v2496 = vpop.f32.mrb[0].mxu0
        %v2497 = vadd.f32 %v1510, %v2496
        %v2498 = vpop.f32.mrb[0].mxu0
        %2499 = vmatprep.mubr.f32.mxu0 0.0
        %2500 = vmatmul.mubr.f32.gmra.mrb[0].mxu0 %v1834
        %v2501 = vpop.f32.mrb[0].mxu0
        %v2502 = vadd.f32 %v1510, %v2501
        %v2503 = vpop.f32.mrb[0].mxu0
        %2504 = vmatprep.mubr.f32.mxu0 0.0
        %2505 = vmatmul.mubr.f32.gmra.mrb[0].mxu0 %v1837
        %v2506 = vpop.f32.mrb[0].mxu0
        %v2507 = vadd.f32 %v1510, %v2506
        %v2508 = vpop.f32.mrb[0].mxu0
        %2509 = vmatprep.mubr.f32.mxu0 0.0
        %2510 = vmatmul.mubr.f32.gmra.mrb[0].mxu0 %v1840
        %v2511 = vpop.f32.mrb[0].mxu0
        %v2512 = vadd.f32 %v1510, %v2511
        %v2513 = vpop.f32.mrb[0].mxu0
        %2514 = vmatprep.mubr.f32.mxu0 0.0
        %2515 = vmatmul.mubr.f32.gmra.mrb[0].mxu0 %v1843
        %v2516 = vpop.f32.mrb[0].mxu0
        %v2517 = vadd.f32 %v1510, %v2516
        %v2518 = vpop.f32.mrb[0].mxu0
        %2519 = vmatprep.mubr.f32.mxu0 0.0
        %2520 = vmatmul.mubr.f32.gmra.mrb[0].mxu0 %v1846
        %v2521 = vpop.f32.mrb[0].mxu0
        %v2522 = vadd.f32 %v1510, %v2521
        %v2523 = vpop.f32.mrb[0].mxu0
        %2524 = vmatprep.mubr.f32.mxu0 0.0
        %2525 = vmatmul.mubr.f32.gmra.mrb[0].mxu0 %v1849
        %v2526 = vpop.f32.mrb[0].mxu0
        %v2527 = vadd.f32 %v1510, %v2526
        %v2528 = vpop.f32.mrb[0].mxu0
        %2529 = vmatprep.mubr.f32.mxu0 0.0
        %2530 = vmatmul.mubr.f32.gmra.mrb[0].mxu0 %v1852
        %v2531 = vpop.f32.mrb[0].mxu0
        %v2532 = vadd.f32 %v1510, %v2531
        %v2533 = vpop.f32.mrb[0].mxu0
        %2534 = vmatprep.mubr.f32.mxu0 0.0
        %2535 = vmatmul.mubr.f32.gmra.mrb[0].mxu0 %v1855
        %v2536 = vpop.f32.mrb[0].mxu0
        %v2537 = vadd.f32 %v1510, %v2536
        %v2538 = vpop.f32.mrb[0].mxu0
        %2539 = vmatprep.mubr.f32.mxu0 0.0
        %2540 = vmatmul.mubr.f32.gmra.mrb[0].mxu0 %v1858
        %v2541 = vpop.f32.mrb[0].mxu0
        %v2542 = vadd.f32 %v1510, %v2541
        %v2543 = vpop.f32.mrb[0].mxu0
        %2544 = vmatprep.mubr.f32.mxu0 0.0
        %2545 = vmatmul.mubr.f32.gmra.mrb[0].mxu0 %v1861
        %v2546 = vpop.f32.mrb[0].mxu0
        %v2547 = vadd.f32 %v1510, %v2546
        %v2548 = vpop.f32.mrb[0].mxu0
        %2549 = vmatprep.mubr.f32.mxu0 0.0
        %2550 = vmatmul.mubr.f32.gmra.mrb[0].mxu0 %v1864
        %v2551 = vpop.f32.mrb[0].mxu0
        %v2552 = vadd.f32 %v1510, %v2551
        %v2553 = vpop.f32.mrb[0].mxu0
        %2554 = vmatprep.mubr.f32.mxu0 0.0
        %2555 = vmatmul.mubr.f32.gmra.mrb[0].mxu0 %v1867
        %v2556 = vpop.f32.mrb[0].mxu0
        %v2557 = vadd.f32 %v1510, %v2556
        %v2558 = vpop.f32.mrb[0].mxu0
        %2559 = vmatprep.mubr.f32.mxu0 0.0
        %2560 = vmatmul.mubr.f32.gmra.mrb[0].mxu0 %v1870
        %v2561 = vpop.f32.mrb[0].mxu0
        %v2562 = vadd.f32 %v1510, %v2561
        %v2563 = vpop.f32.mrb[0].mxu0
        %2564 = vmatprep.mubr.f32.mxu0 0.0
        %2565 = vmatmul.mubr.f32.gmra.mrb[0].mxu0 %v1873
        %v2566 = vpop.f32.mrb[0].mxu0
        %v2567 = vadd.f32 %v1510, %v2566
        %v2568 = vpop.f32.mrb[0].mxu0
        %2569 = vmatprep.mubr.f32.mxu0 0.0
        %2570 = vmatmul.mubr.f32.gmra.mrb[0].mxu0 %v1876
        %v2571 = vpop.f32.mrb[0].mxu0
        %v2572 = vadd.f32 %v1510, %v2571
        %v2573 = vpop.f32.mrb[0].mxu0
        %2574 = vmatprep.mubr.f32.mxu0 0.0
        %2575 = vmatmul.mubr.f32.gmra.mrb[0].mxu0 %v1879
        %v2576 = vpop.f32.mrb[0].mxu0
        %v2577 = vadd.f32 %v1510, %v2576
        %v2578 = vpop.f32.mrb[0].mxu0
        %2579 = vmatprep.mubr.f32.mxu0 0.0
        %2580 = vmatmul.mubr.f32.gmra.mrb[0].mxu0 %v1882
        %v2581 = vpop.f32.mrb[0].mxu0
        %v2582 = vadd.f32 %v1510, %v2581
        %v2583 = vpop.f32.mrb[0].mxu0
        %2584 = vmatprep.mubr.f32.mxu0 0.0
        %2585 = vmatmul.mubr.f32.gmra.mrb[0].mxu0 %v1885
        %v2586 = vpop.f32.mrb[0].mxu0
        %v2587 = vadd.f32 %v1510, %v2586
        %v2588 = vpop.f32.mrb[0].mxu0
        %2589 = vmatprep.mubr.f32.mxu0 0.0
        %2590 = vmatmul.mubr.f32.gmra.mrb[0].mxu0 %v1888
        %v2591 = vpop.f32.mrb[0].mxu0
        %v2592 = vadd.f32 %v1510, %v2591
        %v2593 = vpop.f32.mrb[0].mxu0
        %2594 = vmatprep.mubr.f32.mxu0 0.0
        %2595 = vmatmul.mubr.f32.gmra.mrb[0].mxu0 %v1891
        %v2596 = vpop.f32.mrb[0].mxu0
        %v2597 = vadd.f32 %v1510, %v2596
        %v2598 = vpop.f32.mrb[0].mxu0
        %2599 = vmatprep.mubr.f32.mxu0 0.0
        %2600 = vmatmul.mubr.f32.gmra.mrb[0].mxu0 %v1894
        %v2601 = vpop.f32.mrb[0].mxu0
        %v2602 = vadd.f32 %v1510, %v2601
        %v2603 = vpop.f32.mrb[0].mxu0
        %2604 = vdwg.mxu0
        %v2605 = vmax.f32 %v1967, 0.0
        %v2606 = vmax.f32 %v1972, 0.0
        %v2607 = vmax.f32 %v1977, 0.0
        %v2608 = vmax.f32 %v1982, 0.0
        %v2609 = vmax.f32 %v1987, 0.0
        %v2610 = vmax.f32 %v1992, 0.0
        %v2611 = vmax.f32 %v1997, 0.0
        %v2612 = vmax.f32 %v2002, 0.0
        %v2613 = vmax.f32 %v2007, 0.0
        %v2614 = vmax.f32 %v2012, 0.0
        %v2615 = vmax.f32 %v2017, 0.0
        %v2616 = vmax.f32 %v2022, 0.0
        %v2617 = vmax.f32 %v2027, 0.0
        %v2618 = vmax.f32 %v2032, 0.0
        %v2619 = vmax.f32 %v2037, 0.0
        %v2620 = vmax.f32 %v2042, 0.0
        %v2621 = vmax.f32 %v2047, 0.0
        %v2622 = vmax.f32 %v2052, 0.0
        %v2623 = vmax.f32 %v2057, 0.0
        %v2624 = vmax.f32 %v2062, 0.0
        %v2625 = vmax.f32 %v2067, 0.0
        %v2626 = vmax.f32 %v2072, 0.0
        %v2627 = vmax.f32 %v2077, 0.0
        %v2628 = vmax.f32 %v2082, 0.0
        %v2629 = vmax.f32 %v2087, 0.0
        %v2630 = vmax.f32 %v2092, 0.0
        %v2631 = vmax.f32 %v2097, 0.0
        %v2632 = vmax.f32 %v2102, 0.0
        %v2633 = vmax.f32 %v2107, 0.0
        %v2634 = vmax.f32 %v2112, 0.0
        %v2635 = vmax.f32 %v2117, 0.0
        %v2636 = vmax.f32 %v2122, 0.0
        %v2637 = vmax.f32 %v2127, 0.0
        %v2638 = vmax.f32 %v2132, 0.0
        %v2639 = vmax.f32 %v2137, 0.0
        %v2640 = vmax.f32 %v2142, 0.0
        %v2641 = vmax.f32 %v2147, 0.0
        %v2642 = vmax.f32 %v2152, 0.0
        %v2643 = vmax.f32 %v2157, 0.0
        %v2644 = vmax.f32 %v2162, 0.0
        %v2645 = vmax.f32 %v2167, 0.0
        %v2646 = vmax.f32 %v2172, 0.0
        %v2647 = vmax.f32 %v2177, 0.0
        %v2648 = vmax.f32 %v2182, 0.0
        %v2649 = vmax.f32 %v2187, 0.0
        %v2650 = vmax.f32 %v2192, 0.0
        %v2651 = vmax.f32 %v2197, 0.0
        %v2652 = vmax.f32 %v2202, 0.0
        %v2653 = vmax.f32 %v2207, 0.0
        %v2654 = vmax.f32 %v2212, 0.0
        %v2655 = vmax.f32 %v2217, 0.0
        %v2656 = vmax.f32 %v2222, 0.0
        %v2657 = vmax.f32 %v2227, 0.0
        %v2658 = vmax.f32 %v2232, 0.0
        %v2659 = vmax.f32 %v2237, 0.0
        %v2660 = vmax.f32 %v2242, 0.0
        %v2661 = vmax.f32 %v2247, 0.0
        %v2662 = vmax.f32 %v2252, 0.0
        %v2663 = vmax.f32 %v2257, 0.0
        %v2664 = vmax.f32 %v2262, 0.0
        %v2665 = vmax.f32 %v2267, 0.0
        %v2666 = vmax.f32 %v2272, 0.0
        %v2667 = vmax.f32 %v2277, 0.0
        %v2668 = vmax.f32 %v2282, 0.0
        %v2669 = vmax.f32 %v2287, 0.0
        %v2670 = vmax.f32 %v2292, 0.0
        %v2671 = vmax.f32 %v2297, 0.0
        %v2672 = vmax.f32 %v2302, 0.0
        %v2673 = vmax.f32 %v2307, 0.0
        %v2674 = vmax.f32 %v2312, 0.0
        %v2675 = vmax.f32 %v2317, 0.0
        %v2676 = vmax.f32 %v2322, 0.0
        %v2677 = vmax.f32 %v2327, 0.0
        %v2678 = vmax.f32 %v2332, 0.0
        %v2679 = vmax.f32 %v2337, 0.0
        %v2680 = vmax.f32 %v2342, 0.0
        %v2681 = vmax.f32 %v2347, 0.0
        %v2682 = vmax.f32 %v2352, 0.0
        %v2683 = vmax.f32 %v2357, 0.0
        %v2684 = vmax.f32 %v2362, 0.0
        %v2685 = vmax.f32 %v2367, 0.0
        %v2686 = vmax.f32 %v2372, 0.0
        %v2687 = vmax.f32 %v2377, 0.0
        %v2688 = vmax.f32 %v2382, 0.0
        %v2689 = vmax.f32 %v2387, 0.0
        %v2690 = vmax.f32 %v2392, 0.0
        %v2691 = vmax.f32 %v2397, 0.0
        %v2692 = vmax.f32 %v2402, 0.0
        %v2693 = vmax.f32 %v2407, 0.0
        %v2694 = vmax.f32 %v2412, 0.0
        %v2695 = vmax.f32 %v2417, 0.0
        %v2696 = vmax.f32 %v2422, 0.0
        %v2697 = vmax.f32 %v2427, 0.0
        %v2698 = vmax.f32 %v2432, 0.0
        %v2699 = vmax.f32 %v2437, 0.0
        %v2700 = vmax.f32 %v2442, 0.0
        %v2701 = vmax.f32 %v2447, 0.0
        %v2702 = vmax.f32 %v2452, 0.0
        %v2703 = vmax.f32 %v2457, 0.0
        %v2704 = vmax.f32 %v2462, 0.0
        %v2705 = vmax.f32 %v2467, 0.0
        %v2706 = vmax.f32 %v2472, 0.0
        %v2707 = vmax.f32 %v2477, 0.0
        %v2708 = vmax.f32 %v2482, 0.0
        %v2709 = vmax.f32 %v2487, 0.0
        %v2710 = vmax.f32 %v2492, 0.0
        %v2711 = vmax.f32 %v2497, 0.0
        %v2712 = vmax.f32 %v2502, 0.0
        %v2713 = vmax.f32 %v2507, 0.0
        %v2714 = vmax.f32 %v2512, 0.0
        %v2715 = vmax.f32 %v2517, 0.0
        %v2716 = vmax.f32 %v2522, 0.0
        %v2717 = vmax.f32 %v2527, 0.0
        %v2718 = vmax.f32 %v2532, 0.0
        %v2719 = vmax.f32 %v2537, 0.0
        %v2720 = vmax.f32 %v2542, 0.0
        %v2721 = vmax.f32 %v2547, 0.0
        %v2722 = vmax.f32 %v2552, 0.0
        %v2723 = vmax.f32 %v2557, 0.0
        %v2724 = vmax.f32 %v2562, 0.0
        %v2725 = vmax.f32 %v2567, 0.0
        %v2726 = vmax.f32 %v2572, 0.0
        %v2727 = vmax.f32 %v2577, 0.0
        %v2728 = vmax.f32 %v2582, 0.0
        %v2729 = vmax.f32 %v2587, 0.0
        %v2730 = vmax.f32 %v2592, 0.0
        %v2731 = vmax.f32 %v2597, 0.0
        %v2732 = vmax.f32 %v2602, 0.0
        %2734 = vset.pattern.permute.xlu0 0
        %2735 = vperm.xlu0 %2734, %v280
        %v2736 = vpop.permute.xlu0 %2735
        %v2739 = vsel %vm1511, %v277, 0
        %v2742 = vsel %vm1511, %v2605, 0
        %v2745 = vsel %vm1511, %v2606, 0
        %v2748 = vsel %vm1511, %v2607, 0
        %v2751 = vsel %vm1511, %v2608, 0
        %v2754 = vsel %vm1511, %v2609, 0
        %v2757 = vsel %vm1511, %v2610, 0
        %v2760 = vsel %vm1511, %v2611, 0
        %v2763 = vsel %vm1511, %v2612, 0
        %v2766 = vsel %vm1511, %v2613, 0
        %v2769 = vsel %vm1511, %v2614, 0
        %v2772 = vsel %vm1511, %v2615, 0
        %v2775 = vsel %vm1511, %v2616, 0
        %v2778 = vsel %vm1511, %v2617, 0
        %v2781 = vsel %vm1511, %v2618, 0
        %v2784 = vsel %vm1511, %v2619, 0
        %v2787 = vsel %vm1511, %v2620, 0
        %v2790 = vsel %vm1511, %v2621, 0
        %v2793 = vsel %vm1511, %v2622, 0
        %v2796 = vsel %vm1511, %v2623, 0
        %v2799 = vsel %vm1511, %v2624, 0
        %v2802 = vsel %vm1511, %v2625, 0
        %v2805 = vsel %vm1511, %v2626, 0
        %v2808 = vsel %vm1511, %v2627, 0
        %v2811 = vsel %vm1511, %v2628, 0
        %v2814 = vsel %vm1511, %v2629, 0
        %v2817 = vsel %vm1511, %v2630, 0
        %v2820 = vsel %vm1511, %v2631, 0
        %v2823 = vsel %vm1511, %v2632, 0
        %v2826 = vsel %vm1511, %v2633, 0
        %v2829 = vsel %vm1511, %v2634, 0
        %v2832 = vsel %vm1511, %v2635, 0
        %v2835 = vsel %vm1511, %v2636, 0
        %v2838 = vsel %vm1511, %v2637, 0
        %v2841 = vsel %vm1511, %v2638, 0
        %v2844 = vsel %vm1511, %v2639, 0
        %v2847 = vsel %vm1511, %v2640, 0
        %v2850 = vsel %vm1511, %v2641, 0
        %v2853 = vsel %vm1511, %v2642, 0
        %v2856 = vsel %vm1511, %v2643, 0
        %v2859 = vsel %vm1511, %v2644, 0
        %v2862 = vsel %vm1511, %v2645, 0
        %v2865 = vsel %vm1511, %v2646, 0
        %v2868 = vsel %vm1511, %v2647, 0
        %v2871 = vsel %vm1511, %v2648, 0
        %v2874 = vsel %vm1511, %v2649, 0
        %v2877 = vsel %vm1511, %v2650, 0
        %v2880 = vsel %vm1511, %v2651, 0
        %v2883 = vsel %vm1511, %v2652, 0
        %v2886 = vsel %vm1511, %v2653, 0
        %v2889 = vsel %vm1511, %v2654, 0
        %v2892 = vsel %vm1511, %v2655, 0
        %v2895 = vsel %vm1511, %v2656, 0
        %v2898 = vsel %vm1511, %v2657, 0
        %v2901 = vsel %vm1511, %v2658, 0
        %v2904 = vsel %vm1511, %v2659, 0
        %v2907 = vsel %vm1511, %v2660, 0
        %v2910 = vsel %vm1511, %v2661, 0
        %v2913 = vsel %vm1511, %v2662, 0
        %v2916 = vsel %vm1511, %v2663, 0
        %v2919 = vsel %vm1511, %v2664, 0
        %v2922 = vsel %vm1511, %v2665, 0
        %v2925 = vsel %vm1511, %v2666, 0
        %v2928 = vsel %vm1511, %v2667, 0
        %v2931 = vsel %vm1511, %v2668, 0
        %v2934 = vsel %vm1511, %v2669, 0
        %v2937 = vsel %vm1511, %v2670, 0
        %v2940 = vsel %vm1511, %v2671, 0
        %v2943 = vsel %vm1511, %v2672, 0
        %v2946 = vsel %vm1511, %v2673, 0
        %v2949 = vsel %vm1511, %v2674, 0
        %v2952 = vsel %vm1511, %v2675, 0
        %v2955 = vsel %vm1511, %v2676, 0
        %v2958 = vsel %vm1511, %v2677, 0
        %v2961 = vsel %vm1511, %v2678, 0
        %v2964 = vsel %vm1511, %v2679, 0
        %v2967 = vsel %vm1511, %v2680, 0
        %v2970 = vsel %vm1511, %v2681, 0
        %v2973 = vsel %vm1511, %v2682, 0
        %v2976 = vsel %vm1511, %v2683, 0
        %v2979 = vsel %vm1511, %v2684, 0
        %v2982 = vsel %vm1511, %v2685, 0
        %v2985 = vsel %vm1511, %v2686, 0
        %v2988 = vsel %vm1511, %v2687, 0
        %v2991 = vsel %vm1511, %v2688, 0
        %v2994 = vsel %vm1511, %v2689, 0
        %v2997 = vsel %vm1511, %v2690, 0
        %v3000 = vsel %vm1511, %v2691, 0
        %v3003 = vsel %vm1511, %v2692, 0
        %v3006 = vsel %vm1511, %v2693, 0
        %v3009 = vsel %vm1511, %v2694, 0
        %v3012 = vsel %vm1511, %v2695, 0
        %v3015 = vsel %vm1511, %v2696, 0
        %v3018 = vsel %vm1511, %v2697, 0
        %v3021 = vsel %vm1511, %v2698, 0
        %v3024 = vsel %vm1511, %v2699, 0
        %v3027 = vsel %vm1511, %v2700, 0
        %v3030 = vsel %vm1511, %v2701, 0
        %v3033 = vsel %vm1511, %v2702, 0
        %v3036 = vsel %vm1511, %v2703, 0
        %v3039 = vsel %vm1511, %v2704, 0
        %v3042 = vsel %vm1511, %v2705, 0
        %v3045 = vsel %vm1511, %v2706, 0
        %v3048 = vsel %vm1511, %v2707, 0
        %v3051 = vsel %vm1511, %v2708, 0
        %v3054 = vsel %vm1511, %v2709, 0
        %v3057 = vsel %vm1511, %v2710, 0
        %v3060 = vsel %vm1511, %v2711, 0
        %v3063 = vsel %vm1511, %v2712, 0
        %v3066 = vsel %vm1511, %v2713, 0
        %v3069 = vsel %vm1511, %v2714, 0
        %v3072 = vsel %vm1511, %v2715, 0
        %v3075 = vsel %vm1511, %v2716, 0
        %v3078 = vsel %vm1511, %v2717, 0
        %v3081 = vsel %vm1511, %v2718, 0
        %v3084 = vsel %vm1511, %v2719, 0
        %v3087 = vsel %vm1511, %v2720, 0
        %v3090 = vsel %vm1511, %v2721, 0
        %v3093 = vsel %vm1511, %v2722, 0
        %v3096 = vsel %vm1511, %v2723, 0
        %v3099 = vsel %vm1511, %v2724, 0
        %v3102 = vsel %vm1511, %v2725, 0
        %v3105 = vsel %vm1511, %v2726, 0
        %v3108 = vsel %vm1511, %v2727, 0
        %v3111 = vsel %vm1511, %v2728, 0
        %v3114 = vsel %vm1511, %v2729, 0
        %v3117 = vsel %vm1511, %v2730, 0
        %v3120 = vsel %vm1511, %v2731, 0
        %v3123 = vsel %vm1511, %v2732, 0
        %3125 = vmatprep.subr.mxu0 0.0
        %3126 = vmatpush1.xpose.msra.mxu0 %v2742
        %3127 = vmatprep.subr.mxu0 0.0
        %3128 = vmatpush1.xpose.msra.mxu0 %v2745
        %3129 = vmatprep.subr.mxu0 0.0
        %3130 = vmatpush1.xpose.msra.mxu0 %v2748
        %3131 = vmatprep.subr.mxu0 0.0
        %3132 = vmatpush1.xpose.msra.mxu0 %v2751
        %3133 = vmatprep.subr.mxu0 0.0
        %3134 = vmatpush1.xpose.msra.mxu0 %v2754
        %3135 = vmatprep.subr.mxu0 0.0
        %3136 = vmatpush1.xpose.msra.mxu0 %v2757
        %3137 = vmatprep.subr.mxu0 0.0
        %3138 = vmatpush1.xpose.msra.mxu0 %v2760
        %3139 = vmatprep.subr.mxu0 0.0
        %3140 = vmatpush1.xpose.msra.mxu0 %v2763
        %3141 = vmatprep.subr.mxu0 0.0
        %3142 = vmatpush1.xpose.msra.mxu0 %v2766
        %3143 = vmatprep.subr.mxu0 0.0
        %3144 = vmatpush1.xpose.msra.mxu0 %v2769
        %3145 = vmatprep.subr.mxu0 0.0
        %3146 = vmatpush1.xpose.msra.mxu0 %v2772
        %3147 = vmatprep.subr.mxu0 0.0
        %3148 = vmatpush1.xpose.msra.mxu0 %v2775
        %3149 = vmatprep.subr.mxu0 0.0
        %3150 = vmatpush1.xpose.msra.mxu0 %v2778
        %3151 = vmatprep.subr.mxu0 0.0
        %3152 = vmatpush1.xpose.msra.mxu0 %v2781
        %3153 = vmatprep.subr.mxu0 0.0
        %3154 = vmatpush1.xpose.msra.mxu0 %v2784
        %3155 = vmatprep.subr.mxu0 0.0
        %3156 = vmatpush1.xpose.msra.mxu0 %v2787
        %3157 = vmatprep.subr.mxu0 0.0
        %3158 = vmatpush1.xpose.msra.mxu0 %v2790
        %3159 = vmatprep.subr.mxu0 0.0
        %3160 = vmatpush1.xpose.msra.mxu0 %v2793
        %3161 = vmatprep.subr.mxu0 0.0
        %3162 = vmatpush1.xpose.msra.mxu0 %v2796
        %3163 = vmatprep.subr.mxu0 0.0
        %3164 = vmatpush1.xpose.msra.mxu0 %v2799
        %3165 = vmatprep.subr.mxu0 0.0
        %3166 = vmatpush1.xpose.msra.mxu0 %v2802
        %3167 = vmatprep.subr.mxu0 0.0
        %3168 = vmatpush1.xpose.msra.mxu0 %v2805
        %3169 = vmatprep.subr.mxu0 0.0
        %3170 = vmatpush1.xpose.msra.mxu0 %v2808
        %3171 = vmatprep.subr.mxu0 0.0
        %3172 = vmatpush1.xpose.msra.mxu0 %v2811
        %3173 = vmatprep.subr.mxu0 0.0
        %3174 = vmatpush1.xpose.msra.mxu0 %v2814
        %3175 = vmatprep.subr.mxu0 0.0
        %3176 = vmatpush1.xpose.msra.mxu0 %v2817
        %3177 = vmatprep.subr.mxu0 0.0
        %3178 = vmatpush1.xpose.msra.mxu0 %v2820
        %3179 = vmatprep.subr.mxu0 0.0
        %3180 = vmatpush1.xpose.msra.mxu0 %v2823
        %3181 = vmatprep.subr.mxu0 0.0
        %3182 = vmatpush1.xpose.msra.mxu0 %v2826
        %3183 = vmatprep.subr.mxu0 0.0
        %3184 = vmatpush1.xpose.msra.mxu0 %v2829
        %3185 = vmatprep.subr.mxu0 0.0
        %3186 = vmatpush1.xpose.msra.mxu0 %v2832
        %3187 = vmatprep.subr.mxu0 0.0
        %3188 = vmatpush1.xpose.msra.mxu0 %v2835
        %3189 = vmatprep.mubr.f32.mxu0 0.0
        %3190 = vmatmul.mubr.f32.gmra.mrb[0].mxu0 %v2739
        %v3191 = vpop.f32.mrb[0].mxu0
        %v3192 = vadd.f32 %v2736, %v3191
        %v3193 = vpop.f32.mrb[0].mxu0
        %v3194 = vadd.f32 %v2736, %v3193
        %3195 = vdwg.mxu0
        %3196 = vmatprep.subr.mxu0 0.0
        %3197 = vmatpush1.xpose.msra.mxu0 %v2838
        %3198 = vmatprep.subr.mxu0 0.0
        %3199 = vmatpush1.xpose.msra.mxu0 %v2841
        %3200 = vmatprep.subr.mxu0 0.0
        %3201 = vmatpush1.xpose.msra.mxu0 %v2844
        %3202 = vmatprep.subr.mxu0 0.0
        %3203 = vmatpush1.xpose.msra.mxu0 %v2847
        %3204 = vmatprep.subr.mxu0 0.0
        %3205 = vmatpush1.xpose.msra.mxu0 %v2850
        %3206 = vmatprep.subr.mxu0 0.0
        %3207 = vmatpush1.xpose.msra.mxu0 %v2853
        %3208 = vmatprep.subr.mxu0 0.0
        %3209 = vmatpush1.xpose.msra.mxu0 %v2856
        %3210 = vmatprep.subr.mxu0 0.0
        %3211 = vmatpush1.xpose.msra.mxu0 %v2859
        %3212 = vmatprep.subr.mxu0 0.0
        %3213 = vmatpush1.xpose.msra.mxu0 %v2862
        %3214 = vmatprep.subr.mxu0 0.0
        %3215 = vmatpush1.xpose.msra.mxu0 %v2865
        %3216 = vmatprep.subr.mxu0 0.0
        %3217 = vmatpush1.xpose.msra.mxu0 %v2868
        %3218 = vmatprep.subr.mxu0 0.0
        %3219 = vmatpush1.xpose.msra.mxu0 %v2871
        %3220 = vmatprep.subr.mxu0 0.0
        %3221 = vmatpush1.xpose.msra.mxu0 %v2874
        %3222 = vmatprep.subr.mxu0 0.0
        %3223 = vmatpush1.xpose.msra.mxu0 %v2877
        %3224 = vmatprep.subr.mxu0 0.0
        %3225 = vmatpush1.xpose.msra.mxu0 %v2880
        %3226 = vmatprep.subr.mxu0 0.0
        %3227 = vmatpush1.xpose.msra.mxu0 %v2883
        %3228 = vmatprep.subr.mxu0 0.0
        %3229 = vmatpush1.xpose.msra.mxu0 %v2886
        %3230 = vmatprep.subr.mxu0 0.0
        %3231 = vmatpush1.xpose.msra.mxu0 %v2889
        %3232 = vmatprep.subr.mxu0 0.0
        %3233 = vmatpush1.xpose.msra.mxu0 %v2892
        %3234 = vmatprep.subr.mxu0 0.0
        %3235 = vmatpush1.xpose.msra.mxu0 %v2895
        %3236 = vmatprep.subr.mxu0 0.0
        %3237 = vmatpush1.xpose.msra.mxu0 %v2898
        %3238 = vmatprep.subr.mxu0 0.0
        %3239 = vmatpush1.xpose.msra.mxu0 %v2901
        %3240 = vmatprep.subr.mxu0 0.0
        %3241 = vmatpush1.xpose.msra.mxu0 %v2904
        %3242 = vmatprep.subr.mxu0 0.0
        %3243 = vmatpush1.xpose.msra.mxu0 %v2907
        %3244 = vmatprep.subr.mxu0 0.0
        %3245 = vmatpush1.xpose.msra.mxu0 %v2910
        %3246 = vmatprep.subr.mxu0 0.0
        %3247 = vmatpush1.xpose.msra.mxu0 %v2913
        %3248 = vmatprep.subr.mxu0 0.0
        %3249 = vmatpush1.xpose.msra.mxu0 %v2916
        %3250 = vmatprep.subr.mxu0 0.0
        %3251 = vmatpush1.xpose.msra.mxu0 %v2919
        %3252 = vmatprep.subr.mxu0 0.0
        %3253 = vmatpush1.xpose.msra.mxu0 %v2922
        %3254 = vmatprep.subr.mxu0 0.0
        %3255 = vmatpush1.xpose.msra.mxu0 %v2925
        %3256 = vmatprep.subr.mxu0 0.0
        %3257 = vmatpush1.xpose.msra.mxu0 %v2928
        %3258 = vmatprep.subr.mxu0 0.0
        %3259 = vmatpush1.xpose.msra.mxu0 %v2931
        %3260 = vmatprep.mubr.f32.mxu0 0.0
        %3261 = vmatmul.mubr.f32.gmra.mrb[0].mxu0 %v2739
        %v3262 = vpop.f32.mrb[0].mxu0
        %v3263 = vadd.f32 %v2736, %v3262
        %v3264 = vpop.f32.mrb[0].mxu0
        %v3265 = vadd.f32 %v2736, %v3264
        %3266 = vdwg.mxu0
        %3267 = vmatprep.subr.mxu0 0.0
        %3268 = vmatpush1.xpose.msra.mxu0 %v2934
        %3269 = vmatprep.subr.mxu0 0.0
        %3270 = vmatpush1.xpose.msra.mxu0 %v2937
        %3271 = vmatprep.subr.mxu0 0.0
        %3272 = vmatpush1.xpose.msra.mxu0 %v2940
        %3273 = vmatprep.subr.mxu0 0.0
        %3274 = vmatpush1.xpose.msra.mxu0 %v2943
        %3275 = vmatprep.subr.mxu0 0.0
        %3276 = vmatpush1.xpose.msra.mxu0 %v2946
        %3277 = vmatprep.subr.mxu0 0.0
        %3278 = vmatpush1.xpose.msra.mxu0 %v2949
        %3279 = vmatprep.subr.mxu0 0.0
        %3280 = vmatpush1.xpose.msra.mxu0 %v2952
        %3281 = vmatprep.subr.mxu0 0.0
        %3282 = vmatpush1.xpose.msra.mxu0 %v2955
        %3283 = vmatprep.subr.mxu0 0.0
        %3284 = vmatpush1.xpose.msra.mxu0 %v2958
        %3285 = vmatprep.subr.mxu0 0.0
        %3286 = vmatpush1.xpose.msra.mxu0 %v2961
        %3287 = vmatprep.subr.mxu0 0.0
        %3288 = vmatpush1.xpose.msra.mxu0 %v2964
        %3289 = vmatprep.subr.mxu0 0.0
        %3290 = vmatpush1.xpose.msra.mxu0 %v2967
        %3291 = vmatprep.subr.mxu0 0.0
        %3292 = vmatpush1.xpose.msra.mxu0 %v2970
        %3293 = vmatprep.subr.mxu0 0.0
        %3294 = vmatpush1.xpose.msra.mxu0 %v2973
        %3295 = vmatprep.subr.mxu0 0.0
        %3296 = vmatpush1.xpose.msra.mxu0 %v2976
        %3297 = vmatprep.subr.mxu0 0.0
        %3298 = vmatpush1.xpose.msra.mxu0 %v2979
        %3299 = vmatprep.subr.mxu0 0.0
        %3300 = vmatpush1.xpose.msra.mxu0 %v2982
        %3301 = vmatprep.subr.mxu0 0.0
        %3302 = vmatpush1.xpose.msra.mxu0 %v2985
        %3303 = vmatprep.subr.mxu0 0.0
        %3304 = vmatpush1.xpose.msra.mxu0 %v2988
        %3305 = vmatprep.subr.mxu0 0.0
        %3306 = vmatpush1.xpose.msra.mxu0 %v2991
        %3307 = vmatprep.subr.mxu0 0.0
        %3308 = vmatpush1.xpose.msra.mxu0 %v2994
        %3309 = vmatprep.subr.mxu0 0.0
        %3310 = vmatpush1.xpose.msra.mxu0 %v2997
        %3311 = vmatprep.subr.mxu0 0.0
        %3312 = vmatpush1.xpose.msra.mxu0 %v3000
        %3313 = vmatprep.subr.mxu0 0.0
        %3314 = vmatpush1.xpose.msra.mxu0 %v3003
        %3315 = vmatprep.subr.mxu0 0.0
        %3316 = vmatpush1.xpose.msra.mxu0 %v3006
        %3317 = vmatprep.subr.mxu0 0.0
        %3318 = vmatpush1.xpose.msra.mxu0 %v3009
        %3319 = vmatprep.subr.mxu0 0.0
        %3320 = vmatpush1.xpose.msra.mxu0 %v3012
        %3321 = vmatprep.subr.mxu0 0.0
        %3322 = vmatpush1.xpose.msra.mxu0 %v3015
        %3323 = vmatprep.subr.mxu0 0.0
        %3324 = vmatpush1.xpose.msra.mxu0 %v3018
        %3325 = vmatprep.subr.mxu0 0.0
        %3326 = vmatpush1.xpose.msra.mxu0 %v3021
        %3327 = vmatprep.subr.mxu0 0.0
        %3328 = vmatpush1.xpose.msra.mxu0 %v3024
        %3329 = vmatprep.subr.mxu0 0.0
        %3330 = vmatpush1.xpose.msra.mxu0 %v3027
        %3331 = vmatprep.mubr.f32.mxu0 0.0
        %3332 = vmatmul.mubr.f32.gmra.mrb[0].mxu0 %v2739
        %v3333 = vpop.f32.mrb[0].mxu0
        %v3334 = vadd.f32 %v2736, %v3333
        %v3335 = vpop.f32.mrb[0].mxu0
        %v3336 = vadd.f32 %v2736, %v3335
        %3337 = vdwg.mxu0
        %3338 = vmatprep.subr.mxu0 0.0
        %3339 = vmatpush1.xpose.msra.mxu0 %v3030
        %3340 = vmatprep.subr.mxu0 0.0
        %3341 = vmatpush1.xpose.msra.mxu0 %v3033
        %3342 = vmatprep.subr.mxu0 0.0
        %3343 = vmatpush1.xpose.msra.mxu0 %v3036
        %3344 = vmatprep.subr.mxu0 0.0
        %3345 = vmatpush1.xpose.msra.mxu0 %v3039
        %3346 = vmatprep.subr.mxu0 0.0
        %3347 = vmatpush1.xpose.msra.mxu0 %v3042
        %3348 = vmatprep.subr.mxu0 0.0
        %3349 = vmatpush1.xpose.msra.mxu0 %v3045
        %3350 = vmatprep.subr.mxu0 0.0
        %3351 = vmatpush1.xpose.msra.mxu0 %v3048
        %3352 = vmatprep.subr.mxu0 0.0
        %3353 = vmatpush1.xpose.msra.mxu0 %v3051
        %3354 = vmatprep.subr.mxu0 0.0
        %3355 = vmatpush1.xpose.msra.mxu0 %v3054
        %3356 = vmatprep.subr.mxu0 0.0
        %3357 = vmatpush1.xpose.msra.mxu0 %v3057
        %3358 = vmatprep.subr.mxu0 0.0
        %3359 = vmatpush1.xpose.msra.mxu0 %v3060
        %3360 = vmatprep.subr.mxu0 0.0
        %3361 = vmatpush1.xpose.msra.mxu0 %v3063
        %3362 = vmatprep.subr.mxu0 0.0
        %3363 = vmatpush1.xpose.msra.mxu0 %v3066
        %3364 = vmatprep.subr.mxu0 0.0
        %3365 = vmatpush1.xpose.msra.mxu0 %v3069
        %3366 = vmatprep.subr.mxu0 0.0
        %3367 = vmatpush1.xpose.msra.mxu0 %v3072
        %3368 = vmatprep.subr.mxu0 0.0
        %3369 = vmatpush1.xpose.msra.mxu0 %v3075
        %3370 = vmatprep.subr.mxu0 0.0
        %3371 = vmatpush1.xpose.msra.mxu0 %v3078
        %3372 = vmatprep.subr.mxu0 0.0
        %3373 = vmatpush1.xpose.msra.mxu0 %v3081
        %3374 = vmatprep.subr.mxu0 0.0
        %3375 = vmatpush1.xpose.msra.mxu0 %v3084
        %3376 = vmatprep.subr.mxu0 0.0
        %3377 = vmatpush1.xpose.msra.mxu0 %v3087
        %3378 = vmatprep.subr.mxu0 0.0
        %3379 = vmatpush1.xpose.msra.mxu0 %v3090
        %3380 = vmatprep.subr.mxu0 0.0
        %3381 = vmatpush1.xpose.msra.mxu0 %v3093
        %3382 = vmatprep.subr.mxu0 0.0
        %3383 = vmatpush1.xpose.msra.mxu0 %v3096
        %3384 = vmatprep.subr.mxu0 0.0
        %3385 = vmatpush1.xpose.msra.mxu0 %v3099
        %3386 = vmatprep.subr.mxu0 0.0
        %3387 = vmatpush1.xpose.msra.mxu0 %v3102
        %3388 = vmatprep.subr.mxu0 0.0
        %3389 = vmatpush1.xpose.msra.mxu0 %v3105
        %3390 = vmatprep.subr.mxu0 0.0
        %3391 = vmatpush1.xpose.msra.mxu0 %v3108
        %3392 = vmatprep.subr.mxu0 0.0
        %3393 = vmatpush1.xpose.msra.mxu0 %v3111
        %3394 = vmatprep.subr.mxu0 0.0
        %3395 = vmatpush1.xpose.msra.mxu0 %v3114
        %3396 = vmatprep.subr.mxu0 0.0
        %3397 = vmatpush1.xpose.msra.mxu0 %v3117
        %3398 = vmatprep.subr.mxu0 0.0
        %3399 = vmatpush1.xpose.msra.mxu0 %v3120
        %3400 = vmatprep.subr.mxu0 0.0
        %3401 = vmatpush1.xpose.msra.mxu0 %v3123
        %3402 = vmatprep.mubr.f32.mxu0 0.0
        %3403 = vmatmul.mubr.f32.gmra.mrb[0].mxu0 %v2739
        %v3404 = vpop.f32.mrb[0].mxu0
        %v3405 = vadd.f32 %v2736, %v3404
        %v3406 = vpop.f32.mrb[0].mxu0
        %v3407 = vadd.f32 %v2736, %v3406
        %3408 = vdwg.mxu0
        %v3417 = vcombine.low %v3192, %v3194
        %v3418 = vcombine.low %v3263, %v3265
        %v3419 = vcombine.low %v3334, %v3336
        %v3420 = vcombine.low %v3405, %v3407
        %v3422 = vunpack.c.l.s4 1966171168
        %v3423 = vunpack.c.0.s8 %v3422
        %v3424 = vlaneseq
        %v3425 = vshrl.u32 %v3424, 7
        %v3426 = vsub.s32 %v3423, %v3425
        %v3427 = vrot.slane %v3417, %v3426
        %v3429 = vunpack.c.l.s4 1966171168
        %v3430 = vunpack.c.0.s8 %v3429
        %v3431 = vlaneseq
        %v3432 = vshrl.u32 %v3431, 7
        %v3433 = vsub.s32 %v3430, %v3432
        %v3434 = vrot.slane %v3418, %v3433
        %v3436 = vunpack.c.l.s4 1966171168
        %v3437 = vunpack.c.0.s8 %v3436
        %v3438 = vlaneseq
        %v3439 = vshrl.u32 %v3438, 7
        %v3440 = vsub.s32 %v3437, %v3439
        %v3441 = vrot.slane %v3419, %v3440
        %v3443 = vunpack.c.l.s4 1966171168
        %v3444 = vunpack.c.0.s8 %v3443
        %v3445 = vlaneseq
        %v3446 = vshrl.u32 %v3445, 7
        %v3447 = vsub.s32 %v3444, %v3446
        %v3448 = vrot.slane %v3420, %v3447
        %v3449 = vcombine.low %v3427, %v3434
        %v3450 = vcombine.low %v3441, %v3448
        %v3452 = vunpack.c.l.s4 1966171168
        %v3453 = vunpack.c.0.s8 %v3452
        %v3454 = vlaneseq
        %v3455 = vshrl.u32 %v3454, 7
        %v3456 = vsub.s32 %v3453, %v3455
        %v3457 = vrot.slane %v3449, %v3456
        %v3459 = vunpack.c.l.s4 1966171168
        %v3460 = vunpack.c.0.s8 %v3459
        %v3461 = vlaneseq
        %v3462 = vshrl.u32 %v3461, 7
        %v3463 = vsub.s32 %v3460, %v3462
        %v3464 = vrot.slane %v3450, %v3463
        %v3465 = vcombine.low %v3457, %v3464
        %3467 = vst [vmem:[%s137] sm:$0xff] %v3465
        %s3468 = sand.u32 %s71, 1
        %s3469 = scalar_lea.sflag [#allocation3], %s3468
        %s3470 = sand.u32 %s71, 1
        %s3471 = smul.addr %s3470, 8
        %s3472 = scalar_lea.vmem [#allocation2], %s3471
        // Predicated region
        $region29: #{tpu_custom_call.1} parent=27 // pred_check
          %p3473 = pneg %p81
        $region30: #{tpu_custom_call.1} parent=27 // pred_check_branch
          %3475 = sbr.rel (%p3473) target = $region32
        $region31: #{tpu_custom_call.1} parent=27 // pred_region
          %s3476 = smul.u32 8, %s16
          %s3478 = ssub.s32 128, 128
          %3479 = vsyncadd %s3469, %s3478
          %s3480 = smul.addr %s3476, 16
          %s3481 = scalar_lea.hbm %s2, %s3480
          %s3483 = sshll.u32 %s3472, 4
          %s3484 = int_to_ptr.vmem [resolvable:$true] %s3483
          %3486 = dma.vmem_to_hbm [thread:$0]  %s3484, 128, %s3481, %s3469
        $region32: #{tpu_custom_call.1} parent=27 // pred_fallthru
          _
      $region28: #{tpu_custom_call.1} parent=5 // pred_fallthru
        _
      %p3487 = scmp.le.s32.totalorder 2, %s11
      // Predicated region
      $region33: #{tpu_custom_call.1} parent=5 // pred_check
        %p3488 = pneg %p3487
      $region34: #{tpu_custom_call.1} parent=5 // pred_check_branch
        %3490 = sbr.rel (%p3488) target = $region36
      $region35: #{tpu_custom_call.1} parent=5 // pred_region
        %s3491 = ssub.s32 %s11, 2
        // Predicated region
        $region37: #{tpu_custom_call.1} parent=35 // pred_check
          %p3492 = pneg %p87
        $region38: #{tpu_custom_call.1} parent=35 // pred_check_branch
          %3494 = sbr.rel (%p3492) target = $region40
        $region39: #{tpu_custom_call.1} parent=35 // pred_region
          %s3495 = sand.u32 %s72, 1
          %s3496 = scalar_lea.sflag [#allocation3], %s3495
          %s3497 = sand.u32 %s72, 1
          %s3498 = smul.addr %s3497, 8
          %s3499 = scalar_lea.vmem [#allocation2], %s3498
          %3500 = dma.done %s3496, 128
        $region40: #{tpu_custom_call.1} parent=35 // pred_fallthru
          _
      $region36: #{tpu_custom_call.1} parent=5 // pred_fallthru
        _
    $region6: #{tpu_custom_call.1} parent=1 // loop_footer
      %s15 = sadd.s32 1, %s11
    $region7: #{tpu_custom_call.1} parent=1 // loop_footer_branch
      %10 = sbr.rel target = $region3
    $region8: #{tpu_custom_call.1} parent=1 // loop_exit
      _
    %3501 = vsyncpa [#allocation3], 1
    %s3502 = scalar_lea.sflag [#allocation3], 1
    %3503 = vsyncpa %s3502, 1

</llo_original>
